<compile_context>
chip_gen: v7x
topology: tpu7x:2x2x1
jax: 0.10.0
libtpu: 0.0.40
codegen_flags: <defaults>
</compile_context>

<pallas_src>
import numpy as np

import jax
import jax.numpy as jnp
from jax.experimental import pallas as pl
from jax.experimental.pallas import tpu as pltpu


def _round_up(a, b):
    return -(-a // b) * b


_SQRT_HALF = 0.7071067811865476


def _erf(z, approx_recip=False):
    # Abramowitz & Stegun 7.1.26 polynomial, |abs err| <= 1.5e-7 — effectively
    # exact erf in float32.  Only mul/add/div/exp/where (VPU + EUP).
    p = 0.3275911
    a1, a2, a3, a4, a5 = (0.254829592, -0.284496736, 1.421413741,
                          -1.453152027, 1.061405429)
    za = jnp.abs(z)
    denom = 1.0 + p * za
    if approx_recip:
        t = pl.reciprocal(denom, approx=True)     # EUP slot, otherwise idle
    else:
        t = 1.0 / denom                           # exact for the f32 path
    poly = ((((a5 * t + a4) * t + a3) * t + a2) * t + a1) * t
    e = 1.0 - poly * jnp.exp(-za * za)
    return jnp.where(z < 0.0, -e, e)


def _gelu_exact(x, approx_recip=False):
    # PyTorch nn.GELU default: 0.5 * x * (1 + erf(x / sqrt(2))).
    return 0.5 * x * (1.0 + _erf(x * _SQRT_HALF, approx_recip))


def _make_kernel(hidden, fuse_fc1, approx_recip):
    if fuse_fc1:
        # hidden % 128 == 0: one fc1 matmul, slice the f32 result at the
        # lane-tile boundary (free static view, halves MXU weight pushes).
        def kernel(x_ref, w1_ref, b1_ref, w2_ref, b2_ref, o_ref):
            x = x_ref[...]                                        # (TM, C_in)
            h = jnp.dot(x, w1_ref[...],
                        preferred_element_type=jnp.float32) + b1_ref[...]
            a = h[:, :hidden]
            v = h[:, hidden:]
            g = (_gelu_exact(a, approx_recip) * v).astype(w2_ref.dtype)
            y = jnp.dot(g, w2_ref[...],
                        preferred_element_type=jnp.float32) + b2_ref[...]
            o_ref[...] = y.astype(o_ref.dtype)                    # (TM, C_out)
    else:
        # Non-aligned hidden: fc1 halves pre-split in glue (trace-time, free)
        # so the gate multiply / fc2 input stay lane-aligned in-kernel.
        def kernel(x_ref, w1a_ref, b1a_ref, w1b_ref, b1b_ref, w2_ref, b2_ref,
                   o_ref):
            x = x_ref[...]                                        # (TM, C_in)
            a = jnp.dot(x, w1a_ref[...],
                        preferred_element_type=jnp.float32) + b1a_ref[...]
            v = jnp.dot(x, w1b_ref[...],
                        preferred_element_type=jnp.float32) + b1b_ref[...]
            g = (_gelu_exact(a, approx_recip) * v).astype(w2_ref.dtype)
            y = jnp.dot(g, w2_ref[...],
                        preferred_element_type=jnp.float32) + b2_ref[...]
            o_ref[...] = y.astype(o_ref.dtype)                    # (TM, C_out)
    return kernel


def _const_spec(shape, pipeline_mode):
    # Constant index_map -> block resident across grid steps (weights/biases).
    nd = len(shape)
    if pipeline_mode is None:
        return pl.BlockSpec(shape, lambda i: (0,) * nd)
    return pl.BlockSpec(shape, lambda i: (0,) * nd, pipeline_mode=pipeline_mode)


def glu_forward(x, params, *, tm=None, compute_dtype=jnp.bfloat16,
                out_dtype=None):
    """GLU forward.  x: (..., C_in) -> (..., C_out).  Dropout(p=0) == identity."""
    w1, b1 = params["w1"], params["b1"]          # (C_in, 2*hidden), (2*hidden,)
    w2, b2 = params["w2"], params["b2"]          # (hidden, C_out), (C_out,)
    c_in, two_h = w1.shape
    hidden = two_h // 2
    c_out = w2.shape[1]

    lead = x.shape[:-1]
    x2d = x.reshape(-1, c_in)
    m = x2d.shape[0]
    if out_dtype is None:
        out_dtype = x.dtype
    cd = np.dtype(compute_dtype)
    approx_recip = cd != np.dtype(np.float32)

    # Matmul inputs in compute dtype (bf16 by default); biases stay f32 since
    # they are added onto the f32 MXU accumulators.
    x2d = x2d.astype(cd)
    b2r = b2.astype(jnp.float32).reshape(1, c_out)

    fuse_fc1 = (hidden % 128 == 0)
    if fuse_fc1:
        weight_args = (w1.astype(cd),
                       b1.astype(jnp.float32).reshape(1, two_h),
                       w2.astype(cd), b2r)
    else:
        weight_args = (w1[:, :hidden].astype(cd),
                       b1[:hidden].astype(jnp.float32).reshape(1, hidden),
                       w1[:, hidden:].astype(cd),
                       b1[hidden:].astype(jnp.float32).reshape(1, hidden),
                       w2.astype(cd), b2r)

    # Row tile.  No jnp.pad / out[:m] slice: grid = cdiv(m, tm) and Pallas pads
    # the ragged last input block / masks the partial output block (each output
    # row only depends on its own input row, so this is exact).
    if tm is None:
        tm = 512                                  # big tiles amortize ~0.35us/step
        if m >= 4 * 8:
            # Keep >= 4 grid steps (>= 2 per TensorCore under megacore).
            tm = min(tm, _round_up(pl.cdiv(m, 4), 8))
    tm = _round_up(max(8, min(int(tm), _round_up(m, 8))), 8)
    grid = (pl.cdiv(m, tm),)

    # Explicit VMEM budget: resident weights (x2 for the double-buffer fallback)
    # + double-buffered x/out tiles + f32 live intermediates.
    w_bytes = (c_in * two_h + hidden * c_out) * cd.itemsize
    b_bytes = (two_h + c_out) * 4
    io_bytes = (2 * tm * c_in * cd.itemsize
                + 2 * tm * c_out * np.dtype(out_dtype).itemsize)
    live_bytes = tm * (two_h + hidden + c_out) * 4
    budget = 2 * w_bytes + 2 * b_bytes + io_bytes + live_bytes
    try:
        phys = int(pltpu.get_tpu_info().vmem_capacity_bytes)
    except Exception:
        phys = 64 * 1024 * 1024                   # conservative (v7x per-TC)
    vmem_limit = int(min(0.75 * phys, max(16 * 1024 * 1024, 1.5 * budget)))

    kernel = _make_kernel(hidden, fuse_fc1, approx_recip)

    def call(weight_mode):
        in_specs = [pl.BlockSpec((tm, c_in), lambda i: (i, 0))]   # x row tile
        in_specs += [_const_spec(a.shape, weight_mode) for a in weight_args]
        return pl.pallas_call(
            kernel,
            out_shape=jax.ShapeDtypeStruct((m, c_out), out_dtype),
            grid_spec=pltpu.PrefetchScalarGridSpec(
                num_scalar_prefetch=0,
                grid=grid,
                in_specs=in_specs,
                out_specs=pl.BlockSpec((tm, c_out), lambda i: (i, 0)),
            ),
            compiler_params=pltpu.CompilerParams(
                dimension_semantics=("parallel",),
                vmem_limit_bytes=vmem_limit),
        )(x2d, *weight_args)

    try:
        # Weights never change across grid steps -> single-buffer them; the
        # freed VMEM headroom is what allows the larger row tile.
        out = call(pl.Buffered(buffer_count=1))
    except Exception:
        out = call(None)   # JAX without pipeline_mode= / Buffered(1) support

    return out.reshape(*lead, c_out)


# ----------------------------------------------------------------------------
# Tests
# ----------------------------------------------------------------------------
if __name__ == "__main__":
    key = jax.random.PRNGKey(0)
    k = jax.random.split(key, 10)

    def ref_glu(x, p, hidden):
        h = x @ p["w1"] + p["b1"]
        a, v = h[..., :hidden], h[..., hidden:]
        return (jax.nn.gelu(a, approximate=False) * v) @ p["w2"] + p["b2"]

    # --- Test 1: module-default config (hidden not 128-aligned -> split fc1
    # path), exact f32 compute, explicit tm=96 so the row grid is ragged
    # (256 rows -> blocks 96/96/64, masked tail).
    B, N, C_in = 2, 128, 32
    hidden_features = 48
    hidden = int(2 * hidden_features / 3)              # 32
    C_out = C_in
    x = jax.random.normal(k[0], (B, N, C_in), jnp.float32)
    params = dict(
        w1=0.05 * jax.random.normal(k[1], (C_in, 2 * hidden), jnp.float32),
        b1=0.05 * jax.random.normal(k[2], (2 * hidden,), jnp.float32),
        w2=0.05 * jax.random.normal(k[3], (hidden, C_out), jnp.float32),
        b2=0.05 * jax.random.normal(k[4], (C_out,), jnp.float32),
    )
    out = jax.block_until_ready(
        glu_forward(x, params, tm=96, compute_dtype=jnp.float32))
    assert out.shape == (B, N, C_out)
    ref = ref_glu(x, params, hidden)
    err = float(jnp.max(jnp.abs(out - ref)))
    assert bool(jnp.allclose(out, ref, atol=5e-3, rtol=5e-2)), \
        f"f32 path mismatch: max abs err = {err}"

    # --- Test 2: 128-aligned hidden (fused fc1 path), default bf16 compute,
    # auto row tile, ragged row count (m=200).
    B2, N2, C2_in, hidden2, C2_out = 2, 100, 64, 128, 64
    x2 = jax.random.normal(k[5], (B2, N2, C2_in), jnp.float32)
    params2 = dict(
        w1=0.03 * jax.random.normal(k[6], (C2_in, 2 * hidden2), jnp.float32),
        b1=0.03 * jax.random.normal(k[7], (2 * hidden2,), jnp.float32),
        w2=0.03 * jax.random.normal(k[8], (hidden2, C2_out), jnp.float32),
        b2=0.03 * jax.random.normal(k[9], (C2_out,), jnp.float32),
    )
    out2 = jax.block_until_ready(glu_forward(x2, params2))
    assert out2.shape == (B2, N2, C2_out)
    ref2 = ref_glu(x2, params2, hidden2)
    err2 = float(jnp.max(jnp.abs(out2 - ref2)))
    assert bool(jnp.allclose(out2, ref2, atol=3e-2, rtol=1e-1)), \
        f"bf16 path mismatch: max abs err = {err2}"

    assert bool(jnp.all(jnp.isfinite(out))) and bool(jnp.all(jnp.isfinite(out2)))
    print("KERNEL_OK")
</pallas_src>

<mosaic_0001>
module attributes {stable_mosaic.version = 11 : i64} {
  func.func @kernel(%arg0: i32, %arg1: memref<96x32xf32, #tpu.memory_space<vmem>>, %arg2: memref<32x32xf32, #tpu.memory_space<vmem>>, %arg3: memref<1x32xf32, #tpu.memory_space<vmem>>, %arg4: memref<32x32xf32, #tpu.memory_space<vmem>>, %arg5: memref<1x32xf32, #tpu.memory_space<vmem>>, %arg6: memref<32x32xf32, #tpu.memory_space<vmem>>, %arg7: memref<1x32xf32, #tpu.memory_space<vmem>>, %arg8: memref<96x32xf32, #tpu.memory_space<vmem>>) attributes {dimension_semantics = [#tpu.dimension_semantics<parallel>], iteration_bounds = array<i64: 3>, scalar_prefetch = 0 : i64, scratch_operands = 0 : i64, tpu.core_type = #tpu.core_type<tc>, window_params = [{transform_indices = @transform_0, window_bounds = array<i64: 96, 32>}, {pipeline_mode = #tpu.pipeline_mode<synchronous>, transform_indices = @transform_1, window_bounds = array<i64: 32, 32>}, {pipeline_mode = #tpu.pipeline_mode<synchronous>, transform_indices = @transform_2, window_bounds = array<i64: 1, 32>}, {pipeline_mode = #tpu.pipeline_mode<synchronous>, transform_indices = @transform_3, window_bounds = array<i64: 32, 32>}, {pipeline_mode = #tpu.pipeline_mode<synchronous>, transform_indices = @transform_4, window_bounds = array<i64: 1, 32>}, {pipeline_mode = #tpu.pipeline_mode<synchronous>, transform_indices = @transform_5, window_bounds = array<i64: 32, 32>}, {pipeline_mode = #tpu.pipeline_mode<synchronous>, transform_indices = @transform_6, window_bounds = array<i64: 1, 32>}, {transform_indices = @transform_7, window_bounds = array<i64: 96, 32>}]} {
    %c0 = arith.constant 0 : index
    %c0_0 = arith.constant 0 : index
    %0 = vector.load %arg1[%c0, %c0_0] : memref<96x32xf32, #tpu.memory_space<vmem>>, vector<96x32xf32>
    %c0_1 = arith.constant 0 : index
    %c0_2 = arith.constant 0 : index
    %1 = vector.load %arg2[%c0_1, %c0_2] : memref<32x32xf32, #tpu.memory_space<vmem>>, vector<32x32xf32>
    %cst = arith.constant dense<0.000000e+00> : vector<96x32xf32>
    %2 = tpu.matmul %0, %1, %cst {dimension_numbers = #tpu.dot_dimension_numbers<[1], [0], [0], [1], [0, 0, 1, 1], [], []>} : vector<96x32xf32>, vector<32x32xf32>, vector<96x32xf32> -> vector<96x32xf32>
    %c0_3 = arith.constant 0 : index
    %c0_4 = arith.constant 0 : index
    %3 = vector.load %arg3[%c0_3, %c0_4] : memref<1x32xf32, #tpu.memory_space<vmem>>, vector<1x32xf32>
    %4 = vector.broadcast %3 : vector<1x32xf32> to vector<96x32xf32>
    %5 = arith.addf %2, %4 : vector<96x32xf32>
    %c0_5 = arith.constant 0 : index
    %c0_6 = arith.constant 0 : index
    %6 = vector.load %arg4[%c0_5, %c0_6] : memref<32x32xf32, #tpu.memory_space<vmem>>, vector<32x32xf32>
    %cst_7 = arith.constant dense<0.000000e+00> : vector<96x32xf32>
    %7 = tpu.matmul %0, %6, %cst_7 {dimension_numbers = #tpu.dot_dimension_numbers<[1], [0], [0], [1], [0, 0, 1, 1], [], []>} : vector<96x32xf32>, vector<32x32xf32>, vector<96x32xf32> -> vector<96x32xf32>
    %c0_8 = arith.constant 0 : index
    %c0_9 = arith.constant 0 : index
    %8 = vector.load %arg5[%c0_8, %c0_9] : memref<1x32xf32, #tpu.memory_space<vmem>>, vector<1x32xf32>
    %9 = vector.broadcast %8 : vector<1x32xf32> to vector<96x32xf32>
    %10 = arith.addf %7, %9 : vector<96x32xf32>
    %cst_10 = arith.constant 5.000000e-01 : f32
    %11 = vector.broadcast %cst_10 : f32 to vector<96x32xf32>
    %12 = arith.mulf %11, %5 : vector<96x32xf32>
    %cst_11 = arith.constant 0.707106769 : f32
    %13 = vector.broadcast %cst_11 : f32 to vector<96x32xf32>
    %14 = arith.mulf %5, %13 : vector<96x32xf32>
    %15 = math.absf %14 : vector<96x32xf32>
    %cst_12 = arith.constant 0.327591091 : f32
    %16 = vector.broadcast %cst_12 : f32 to vector<96x32xf32>
    %17 = arith.mulf %16, %15 : vector<96x32xf32>
    %cst_13 = arith.constant 1.000000e+00 : f32
    %18 = vector.broadcast %cst_13 : f32 to vector<96x32xf32>
    %19 = arith.addf %18, %17 : vector<96x32xf32>
    %cst_14 = arith.constant 1.000000e+00 : f32
    %20 = vector.broadcast %cst_14 : f32 to vector<96x32xf32>
    %21 = arith.divf %20, %19 : vector<96x32xf32>
    %cst_15 = arith.constant 1.06140542 : f32
    %22 = vector.broadcast %cst_15 : f32 to vector<96x32xf32>
    %23 = arith.mulf %22, %21 : vector<96x32xf32>
    %cst_16 = arith.constant -1.45315206 : f32
    %24 = vector.broadcast %cst_16 : f32 to vector<96x32xf32>
    %25 = arith.addf %23, %24 : vector<96x32xf32>
    %26 = arith.mulf %25, %21 : vector<96x32xf32>
    %cst_17 = arith.constant 1.42141378 : f32
    %27 = vector.broadcast %cst_17 : f32 to vector<96x32xf32>
    %28 = arith.addf %26, %27 : vector<96x32xf32>
    %29 = arith.mulf %28, %21 : vector<96x32xf32>
    %cst_18 = arith.constant -0.284496725 : f32
    %30 = vector.broadcast %cst_18 : f32 to vector<96x32xf32>
    %31 = arith.addf %29, %30 : vector<96x32xf32>
    %32 = arith.mulf %31, %21 : vector<96x32xf32>
    %cst_19 = arith.constant 0.254829586 : f32
    %33 = vector.broadcast %cst_19 : f32 to vector<96x32xf32>
    %34 = arith.addf %32, %33 : vector<96x32xf32>
    %35 = arith.mulf %34, %21 : vector<96x32xf32>
    %cst_20 = arith.constant 0.000000e+00 : f32
    %36 = vector.broadcast %cst_20 : f32 to vector<96x32xf32>
    %37 = arith.subf %36, %15 : vector<96x32xf32>
    %38 = arith.mulf %37, %15 : vector<96x32xf32>
    %39 = math.exp %38 : vector<96x32xf32>
    %40 = arith.mulf %35, %39 : vector<96x32xf32>
    %cst_21 = arith.constant 1.000000e+00 : f32
    %41 = vector.broadcast %cst_21 : f32 to vector<96x32xf32>
    %42 = arith.subf %41, %40 : vector<96x32xf32>
    %cst_22 = arith.constant 0.000000e+00 : f32
    %43 = vector.broadcast %cst_22 : f32 to vector<96x32xf32>
    %44 = arith.cmpf olt, %14, %43 : vector<96x32xf32>
    %cst_23 = arith.constant 0.000000e+00 : f32
    %45 = vector.broadcast %cst_23 : f32 to vector<96x32xf32>
    %46 = arith.subf %45, %42 : vector<96x32xf32>
    %47 = arith.select %44, %46, %42 : vector<96x32xi1>, vector<96x32xf32>
    %cst_24 = arith.constant 1.000000e+00 : f32
    %48 = vector.broadcast %cst_24 : f32 to vector<96x32xf32>
    %49 = arith.addf %48, %47 : vector<96x32xf32>
    %50 = arith.mulf %12, %49 : vector<96x32xf32>
    %51 = arith.mulf %50, %10 : vector<96x32xf32>
    %c0_25 = arith.constant 0 : index
    %c0_26 = arith.constant 0 : index
    %52 = vector.load %arg6[%c0_25, %c0_26] : memref<32x32xf32, #tpu.memory_space<vmem>>, vector<32x32xf32>
    %cst_27 = arith.constant dense<0.000000e+00> : vector<96x32xf32>
    %53 = tpu.matmul %51, %52, %cst_27 {dimension_numbers = #tpu.dot_dimension_numbers<[1], [0], [0], [1], [0, 0, 1, 1], [], []>} : vector<96x32xf32>, vector<32x32xf32>, vector<96x32xf32> -> vector<96x32xf32>
    %c0_28 = arith.constant 0 : index
    %c0_29 = arith.constant 0 : index
    %54 = vector.load %arg7[%c0_28, %c0_29] : memref<1x32xf32, #tpu.memory_space<vmem>>, vector<1x32xf32>
    %55 = vector.broadcast %54 : vector<1x32xf32> to vector<96x32xf32>
    %56 = arith.addf %53, %55 : vector<96x32xf32>
    %c0_30 = arith.constant 0 : index
    %c0_31 = arith.constant 0 : index
    %57 = vector.load %arg8[%c0_30, %c0_31] : memref<96x32xf32, #tpu.memory_space<vmem>>, vector<96x32xf32>
    tpu.vector_store %arg8[%c0_30, %c0_31], %56 {strides = array<i32>} : memref<96x32xf32, #tpu.memory_space<vmem>>, vector<96x32xf32>,
    return
  }
  func.func @transform_0(%arg0: i32) -> (i32, i32) {
    %c0_i32 = arith.constant 0 : i32
    %c0_i32_0 = arith.constant 0 : i32
    return %arg0, %c0_i32 : i32, i32
  }
  func.func @transform_1(%arg0: i32) -> (i32, i32) {
    %c0_i32 = arith.constant 0 : i32
    %c0_i32_0 = arith.constant 0 : i32
    %c0_i32_1 = arith.constant 0 : i32
    return %c0_i32, %c0_i32_0 : i32, i32
  }
  func.func @transform_2(%arg0: i32) -> (i32, i32) {
    %c0_i32 = arith.constant 0 : i32
    %c0_i32_0 = arith.constant 0 : i32
    %c0_i32_1 = arith.constant 0 : i32
    return %c0_i32, %c0_i32_0 : i32, i32
  }
  func.func @transform_3(%arg0: i32) -> (i32, i32) {
    %c0_i32 = arith.constant 0 : i32
    %c0_i32_0 = arith.constant 0 : i32
    %c0_i32_1 = arith.constant 0 : i32
    return %c0_i32, %c0_i32_0 : i32, i32
  }
  func.func @transform_4(%arg0: i32) -> (i32, i32) {
    %c0_i32 = arith.constant 0 : i32
    %c0_i32_0 = arith.constant 0 : i32
    %c0_i32_1 = arith.constant 0 : i32
    return %c0_i32, %c0_i32_0 : i32, i32
  }
  func.func @transform_5(%arg0: i32) -> (i32, i32) {
    %c0_i32 = arith.constant 0 : i32
    %c0_i32_0 = arith.constant 0 : i32
    %c0_i32_1 = arith.constant 0 : i32
    return %c0_i32, %c0_i32_0 : i32, i32
  }
  func.func @transform_6(%arg0: i32) -> (i32, i32) {
    %c0_i32 = arith.constant 0 : i32
    %c0_i32_0 = arith.constant 0 : i32
    %c0_i32_1 = arith.constant 0 : i32
    return %c0_i32, %c0_i32_0 : i32, i32
  }
  func.func @transform_7(%arg0: i32) -> (i32, i32) {
    %c0_i32 = arith.constant 0 : i32
    %c0_i32_0 = arith.constant 0 : i32
    return %arg0, %c0_i32 : i32, i32
  }
}

module attributes {stable_mosaic.version = 11 : i64} {
  func.func @kernel(%arg0: i32, %arg1: memref<96x32xf32, #tpu.memory_space<vmem>>, %arg2: memref<32x32xf32, #tpu.memory_space<vmem>>, %arg3: memref<1x32xf32, #tpu.memory_space<vmem>>, %arg4: memref<32x32xf32, #tpu.memory_space<vmem>>, %arg5: memref<1x32xf32, #tpu.memory_space<vmem>>, %arg6: memref<32x32xf32, #tpu.memory_space<vmem>>, %arg7: memref<1x32xf32, #tpu.memory_space<vmem>>, %arg8: memref<96x32xf32, #tpu.memory_space<vmem>>) attributes {dimension_semantics = [#tpu.dimension_semantics<parallel>], iteration_bounds = array<i64: 3>, scalar_prefetch = 0 : i64, scratch_operands = 0 : i64, tpu.core_type = #tpu.core_type<tc>, window_params = [{transform_indices = @transform_0, window_bounds = array<i64: 96, 32>}, {pipeline_mode = #tpu.pipeline_mode<synchronous>, transform_indices = @transform_1, window_bounds = array<i64: 32, 32>}, {pipeline_mode = #tpu.pipeline_mode<synchronous>, transform_indices = @transform_2, window_bounds = array<i64: 1, 32>}, {pipeline_mode = #tpu.pipeline_mode<synchronous>, transform_indices = @transform_3, window_bounds = array<i64: 32, 32>}, {pipeline_mode = #tpu.pipeline_mode<synchronous>, transform_indices = @transform_4, window_bounds = array<i64: 1, 32>}, {pipeline_mode = #tpu.pipeline_mode<synchronous>, transform_indices = @transform_5, window_bounds = array<i64: 32, 32>}, {pipeline_mode = #tpu.pipeline_mode<synchronous>, transform_indices = @transform_6, window_bounds = array<i64: 1, 32>}, {transform_indices = @transform_7, window_bounds = array<i64: 96, 32>}]} {
    %c0 = arith.constant 0 : index
    %c0_0 = arith.constant 0 : index
    %0 = vector.load %arg1[%c0, %c0_0] : memref<96x32xf32, #tpu.memory_space<vmem>>, vector<96x32xf32>
    %c0_1 = arith.constant 0 : index
    %c0_2 = arith.constant 0 : index
    %1 = vector.load %arg2[%c0_1, %c0_2] : memref<32x32xf32, #tpu.memory_space<vmem>>, vector<32x32xf32>
    %cst = arith.constant dense<0.000000e+00> : vector<96x32xf32>
    %2 = tpu.matmul %0, %1, %cst {dimension_numbers = #tpu.dot_dimension_numbers<[1], [0], [0], [1], [0, 0, 1, 1], [], []>} : vector<96x32xf32>, vector<32x32xf32>, vector<96x32xf32> -> vector<96x32xf32>
    %c0_3 = arith.constant 0 : index
    %c0_4 = arith.constant 0 : index
    %3 = vector.load %arg3[%c0_3, %c0_4] : memref<1x32xf32, #tpu.memory_space<vmem>>, vector<1x32xf32>
    %4 = vector.broadcast %3 : vector<1x32xf32> to vector<96x32xf32>
    %5 = arith.addf %2, %4 : vector<96x32xf32>
    %c0_5 = arith.constant 0 : index
    %c0_6 = arith.constant 0 : index
    %6 = vector.load %arg4[%c0_5, %c0_6] : memref<32x32xf32, #tpu.memory_space<vmem>>, vector<32x32xf32>
    %cst_7 = arith.constant dense<0.000000e+00> : vector<96x32xf32>
    %7 = tpu.matmul %0, %6, %cst_7 {dimension_numbers = #tpu.dot_dimension_numbers<[1], [0], [0], [1], [0, 0, 1, 1], [], []>} : vector<96x32xf32>, vector<32x32xf32>, vector<96x32xf32> -> vector<96x32xf32>
    %c0_8 = arith.constant 0 : index
    %c0_9 = arith.constant 0 : index
    %8 = vector.load %arg5[%c0_8, %c0_9] : memref<1x32xf32, #tpu.memory_space<vmem>>, vector<1x32xf32>
    %9 = vector.broadcast %8 : vector<1x32xf32> to vector<96x32xf32>
    %10 = arith.addf %7, %9 : vector<96x32xf32>
    %cst_10 = arith.constant 5.000000e-01 : f32
    %11 = vector.broadcast %cst_10 : f32 to vector<96x32xf32>
    %12 = arith.mulf %11, %5 : vector<96x32xf32>
    %cst_11 = arith.constant 0.707106769 : f32
    %13 = vector.broadcast %cst_11 : f32 to vector<96x32xf32>
    %14 = arith.mulf %5, %13 : vector<96x32xf32>
    %15 = math.absf %14 : vector<96x32xf32>
    %cst_12 = arith.constant 0.327591091 : f32
    %16 = vector.broadcast %cst_12 : f32 to vector<96x32xf32>
    %17 = arith.mulf %16, %15 : vector<96x32xf32>
    %cst_13 = arith.constant 1.000000e+00 : f32
    %18 = vector.broadcast %cst_13 : f32 to vector<96x32xf32>
    %19 = arith.addf %18, %17 : vector<96x32xf32>
    %cst_14 = arith.constant 1.000000e+00 : f32
    %20 = vector.broadcast %cst_14 : f32 to vector<96x32xf32>
    %21 = arith.divf %20, %19 : vector<96x32xf32>
    %cst_15 = arith.constant 1.06140542 : f32
    %22 = vector.broadcast %cst_15 : f32 to vector<96x32xf32>
    %23 = arith.mulf %22, %21 : vector<96x32xf32>
    %cst_16 = arith.constant -1.45315206 : f32
    %24 = vector.broadcast %cst_16 : f32 to vector<96x32xf32>
    %25 = arith.addf %23, %24 : vector<96x32xf32>
    %26 = arith.mulf %25, %21 : vector<96x32xf32>
    %cst_17 = arith.constant 1.42141378 : f32
    %27 = vector.broadcast %cst_17 : f32 to vector<96x32xf32>
    %28 = arith.addf %26, %27 : vector<96x32xf32>
    %29 = arith.mulf %28, %21 : vector<96x32xf32>
    %cst_18 = arith.constant -0.284496725 : f32
    %30 = vector.broadcast %cst_18 : f32 to vector<96x32xf32>
    %31 = arith.addf %29, %30 : vector<96x32xf32>
    %32 = arith.mulf %31, %21 : vector<96x32xf32>
    %cst_19 = arith.constant 0.254829586 : f32
    %33 = vector.broadcast %cst_19 : f32 to vector<96x32xf32>
    %34 = arith.addf %32, %33 : vector<96x32xf32>
    %35 = arith.mulf %34, %21 : vector<96x32xf32>
    %cst_20 = arith.constant 0.000000e+00 : f32
    %36 = vector.broadcast %cst_20 : f32 to vector<96x32xf32>
    %37 = arith.subf %36, %15 : vector<96x32xf32>
    %38 = arith.mulf %37, %15 : vector<96x32xf32>
    %39 = math.exp %38 : vector<96x32xf32>
    %40 = arith.mulf %35, %39 : vector<96x32xf32>
    %cst_21 = arith.constant 1.000000e+00 : f32
    %41 = vector.broadcast %cst_21 : f32 to vector<96x32xf32>
    %42 = arith.subf %41, %40 : vector<96x32xf32>
    %cst_22 = arith.constant 0.000000e+00 : f32
    %43 = vector.broadcast %cst_22 : f32 to vector<96x32xf32>
    %44 = arith.cmpf olt, %14, %43 : vector<96x32xf32>
    %cst_23 = arith.constant 0.000000e+00 : f32
    %45 = vector.broadcast %cst_23 : f32 to vector<96x32xf32>
    %46 = arith.subf %45, %42 : vector<96x32xf32>
    %47 = arith.select %44, %46, %42 : vector<96x32xi1>, vector<96x32xf32>
    %cst_24 = arith.constant 1.000000e+00 : f32
    %48 = vector.broadcast %cst_24 : f32 to vector<96x32xf32>
    %49 = arith.addf %48, %47 : vector<96x32xf32>
    %50 = arith.mulf %12, %49 : vector<96x32xf32>
    %51 = arith.mulf %50, %10 : vector<96x32xf32>
    %c0_25 = arith.constant 0 : index
    %c0_26 = arith.constant 0 : index
    %52 = vector.load %arg6[%c0_25, %c0_26] : memref<32x32xf32, #tpu.memory_space<vmem>>, vector<32x32xf32>
    %cst_27 = arith.constant dense<0.000000e+00> : vector<96x32xf32>
    %53 = tpu.matmul %51, %52, %cst_27 {dimension_numbers = #tpu.dot_dimension_numbers<[1], [0], [0], [1], [0, 0, 1, 1], [], []>} : vector<96x32xf32>, vector<32x32xf32>, vector<96x32xf32> -> vector<96x32xf32>
    %c0_28 = arith.constant 0 : index
    %c0_29 = arith.constant 0 : index
    %54 = vector.load %arg7[%c0_28, %c0_29] : memref<1x32xf32, #tpu.memory_space<vmem>>, vector<1x32xf32>
    %55 = vector.broadcast %54 : vector<1x32xf32> to vector<96x32xf32>
    %56 = arith.addf %53, %55 : vector<96x32xf32>
    %c0_30 = arith.constant 0 : index
    %c0_31 = arith.constant 0 : index
    %57 = vector.load %arg8[%c0_30, %c0_31] : memref<96x32xf32, #tpu.memory_space<vmem>>, vector<96x32xf32>
    tpu.vector_store %arg8[%c0_30, %c0_31], %56 {strides = array<i32>} : memref<96x32xf32, #tpu.memory_space<vmem>>, vector<96x32xf32>,
    return
  }
  func.func @transform_0(%arg0: i32) -> (i32, i32) {
    %c0_i32 = arith.constant 0 : i32
    %c0_i32_0 = arith.constant 0 : i32
    return %arg0, %c0_i32 : i32, i32
  }
  func.func @transform_1(%arg0: i32) -> (i32, i32) {
    %c0_i32 = arith.constant 0 : i32
    %c0_i32_0 = arith.constant 0 : i32
    %c0_i32_1 = arith.constant 0 : i32
    return %c0_i32, %c0_i32_0 : i32, i32
  }
  func.func @transform_2(%arg0: i32) -> (i32, i32) {
    %c0_i32 = arith.constant 0 : i32
    %c0_i32_0 = arith.constant 0 : i32
    %c0_i32_1 = arith.constant 0 : i32
    return %c0_i32, %c0_i32_0 : i32, i32
  }
  func.func @transform_3(%arg0: i32) -> (i32, i32) {
    %c0_i32 = arith.constant 0 : i32
    %c0_i32_0 = arith.constant 0 : i32
    %c0_i32_1 = arith.constant 0 : i32
    return %c0_i32, %c0_i32_0 : i32, i32
  }
  func.func @transform_4(%arg0: i32) -> (i32, i32) {
    %c0_i32 = arith.constant 0 : i32
    %c0_i32_0 = arith.constant 0 : i32
    %c0_i32_1 = arith.constant 0 : i32
    return %c0_i32, %c0_i32_0 : i32, i32
  }
  func.func @transform_5(%arg0: i32) -> (i32, i32) {
    %c0_i32 = arith.constant 0 : i32
    %c0_i32_0 = arith.constant 0 : i32
    %c0_i32_1 = arith.constant 0 : i32
    return %c0_i32, %c0_i32_0 : i32, i32
  }
  func.func @transform_6(%arg0: i32) -> (i32, i32) {
    %c0_i32 = arith.constant 0 : i32
    %c0_i32_0 = arith.constant 0 : i32
    %c0_i32_1 = arith.constant 0 : i32
    return %c0_i32, %c0_i32_0 : i32, i32
  }
  func.func @transform_7(%arg0: i32) -> (i32, i32) {
    %c0_i32 = arith.constant 0 : i32
    %c0_i32_0 = arith.constant 0 : i32
    return %arg0, %c0_i32 : i32, i32
  }
}

</mosaic_0001>

<llo_original>
// kernel: tpu_custom_call.1
$region0: #{tpu_custom_call.1}
  #allocation0 [shape = 'u32[]', space=smem, size = 0x4, offset = 0x4, fixed_abs, tag = 'smem constant byte address 0x4 - core index']
  #allocation1 [shape = 'u32[144,128]{1,0:T(1,128)}', space=vmem, size = 0x12000, scoped, tag = 'internal scratch']
  %s0 = inlined_call_operand.vmem [shape: f32[256,32], index: 0, kind: input, shape index: {}]
  %s1 = inlined_call_operand.vmem [shape: f32[32,32], index: 1, kind: input, shape index: {}]
  %s2 = inlined_call_operand.vmem [shape: f32[1,32], index: 2, kind: input, shape index: {}]
  %s3 = inlined_call_operand.vmem [shape: f32[32,32], index: 3, kind: input, shape index: {}]
  %s4 = inlined_call_operand.vmem [shape: f32[1,32], index: 4, kind: input, shape index: {}]
  %s5 = inlined_call_operand.vmem [shape: f32[32,32], index: 5, kind: input, shape index: {}]
  %s6 = inlined_call_operand.vmem [shape: f32[1,32], index: 6, kind: input, shape index: {}]
  %s7 = inlined_call_operand.vmem [shape: f32[256,32], index: 7, kind: output, shape index: {}]
  %s8 = sld [smem:[#allocation0]]
  $region109: #{tpu_custom_call.1} parent=0
    _
  %s10 = ssub.s32 1, %s8
  %s11 = scalar_select 0, %s10, %s8
  $region1: #{tpu_custom_call.1} parent=0
    #allocation2 [shape = 'u8[98304]{0}', space=vmem, size = 0x18000, scoped, tag = 'output window, operand 0']
    loop: start=0, step=1, limit=5
    $region2: #{tpu_custom_call.1} parent=1 // loop_pre_header
      _
    $region3: #{tpu_custom_call.1} parent=1 // loop_header
      %s13 = sphi 0, %s17
      %p14 = scmp.ge.s32.totalorder %s13, 5
      %s23 = sphi 0, %s25
      %s26 = sphi 0, %s23
      %s27 = sphi 0, %s26
      %s43 = sphi 0, %s27
      %s47 = sphi 0, %s47
      %s49 = sphi 0, %s47
      %s50 = sphi 0, %s49
      %s64 = sphi 0, %s50
      %s68 = sphi 0, %s68
      %s70 = sphi 0, %s68
      %s71 = sphi 0, %s70
      %s85 = sphi 0, %s71
      %s89 = sphi 0, %s89
      %s91 = sphi 0, %s89
      %s92 = sphi 0, %s91
      %s106 = sphi 0, %s92
      %s110 = sphi 0, %s110
      %s112 = sphi 0, %s110
      %s113 = sphi 0, %s112
      %s127 = sphi 0, %s113
      %s131 = sphi 0, %s131
      %s133 = sphi 0, %s131
      %s134 = sphi 0, %s133
      %s148 = sphi 0, %s134
      %s152 = sphi 0, %s152
      %s154 = sphi 0, %s152
      %s155 = sphi 0, %s154
      %s169 = sphi 0, %s155
      %s175 = sphi 0, %s177
      %s178 = sphi 0, %s175
      %s179 = sphi 0, %s178
      %s195 = sphi 0, %s179
    $region4: #{tpu_custom_call.1} parent=1 // loop_header_branch
      %16 = sbr.rel (%p14) target = $region8
    $region5: #{tpu_custom_call.1} parent=1 // loop_body
      %s18 = ssub.s32 %s13, 1
      %s19 = ssub.s32 %s13, 2
      %s20 = sadd.s32 %s13, 1
      %s21 = ssub.s32 %s13, %s20
      %p22 = scmp.eq.s32.totalorder %s21, 0
      %s24 = sadd.s32 %s23, 1
      %s25 = scalar_select %p22, %s23, %s24
      %p28 = pneg %p22
      %p29 = scmp.eq.s32.totalorder %s13, 2
      %p30 = por %p28, %p29
      %p31 = scmp.ne.s32.totalorder %s23, %s26
      %p32 = scmp.eq.s32.totalorder %s13, 0
      %p33 = por %p31, %p32
      %p34 = scmp.ne.s32.totalorder %s23, %s26
      %p35 = scmp.eq.s32.totalorder %s18, 2
      %p36 = por %p34, %p35
      %p37 = scmp.ne.s32.totalorder %s26, %s27
      %p38 = scmp.eq.s32.totalorder %s18, 0
      %p39 = por %p37, %p38
      %p40 = scmp.ne.s32.totalorder %s26, %s27
      %p41 = scmp.eq.s32.totalorder %s19, 2
      %p42 = por %p40, %p41
      %p44 = scmp.ne.s32.totalorder %s27, %s43
      %p45 = scmp.eq.s32.totalorder %s19, 0
      %p46 = por %p44, %p45
      %s48 = sadd.s32 %s47, 1
      %p51 = scmp.eq.s32.totalorder %s13, 2
      %p52 = scmp.ne.s32.totalorder %s47, %s49
      %p53 = scmp.eq.s32.totalorder %s13, 0
      %p54 = por %p52, %p53
      %p55 = scmp.ne.s32.totalorder %s47, %s49
      %p56 = scmp.eq.s32.totalorder %s18, 2
      %p57 = por %p55, %p56
      %p58 = scmp.ne.s32.totalorder %s49, %s50
      %p59 = scmp.eq.s32.totalorder %s18, 0
      %p60 = por %p58, %p59
      %p61 = scmp.ne.s32.totalorder %s49, %s50
      %p62 = scmp.eq.s32.totalorder %s19, 2
      %p63 = por %p61, %p62
      %p65 = scmp.ne.s32.totalorder %s50, %s64
      %p66 = scmp.eq.s32.totalorder %s19, 0
      %p67 = por %p65, %p66
      %s69 = sadd.s32 %s68, 1
      %p72 = scmp.eq.s32.totalorder %s13, 2
      %p73 = scmp.ne.s32.totalorder %s68, %s70
      %p74 = scmp.eq.s32.totalorder %s13, 0
      %p75 = por %p73, %p74
      %p76 = scmp.ne.s32.totalorder %s68, %s70
      %p77 = scmp.eq.s32.totalorder %s18, 2
      %p78 = por %p76, %p77
      %p79 = scmp.ne.s32.totalorder %s70, %s71
      %p80 = scmp.eq.s32.totalorder %s18, 0
      %p81 = por %p79, %p80
      %p82 = scmp.ne.s32.totalorder %s70, %s71
      %p83 = scmp.eq.s32.totalorder %s19, 2
      %p84 = por %p82, %p83
      %p86 = scmp.ne.s32.totalorder %s71, %s85
      %p87 = scmp.eq.s32.totalorder %s19, 0
      %p88 = por %p86, %p87
      %s90 = sadd.s32 %s89, 1
      %p93 = scmp.eq.s32.totalorder %s13, 2
      %p94 = scmp.ne.s32.totalorder %s89, %s91
      %p95 = scmp.eq.s32.totalorder %s13, 0
      %p96 = por %p94, %p95
      %p97 = scmp.ne.s32.totalorder %s89, %s91
      %p98 = scmp.eq.s32.totalorder %s18, 2
      %p99 = por %p97, %p98
      %p100 = scmp.ne.s32.totalorder %s91, %s92
      %p101 = scmp.eq.s32.totalorder %s18, 0
      %p102 = por %p100, %p101
      %p103 = scmp.ne.s32.totalorder %s91, %s92
      %p104 = scmp.eq.s32.totalorder %s19, 2
      %p105 = por %p103, %p104
      %p107 = scmp.ne.s32.totalorder %s92, %s106
      %p108 = scmp.eq.s32.totalorder %s19, 0
      %p109 = por %p107, %p108
      %s111 = sadd.s32 %s110, 1
      %p114 = scmp.eq.s32.totalorder %s13, 2
      %p115 = scmp.ne.s32.totalorder %s110, %s112
      %p116 = scmp.eq.s32.totalorder %s13, 0
      %p117 = por %p115, %p116
      %p118 = scmp.ne.s32.totalorder %s110, %s112
      %p119 = scmp.eq.s32.totalorder %s18, 2
      %p120 = por %p118, %p119
      %p121 = scmp.ne.s32.totalorder %s112, %s113
      %p122 = scmp.eq.s32.totalorder %s18, 0
      %p123 = por %p121, %p122
      %p124 = scmp.ne.s32.totalorder %s112, %s113
      %p125 = scmp.eq.s32.totalorder %s19, 2
      %p126 = por %p124, %p125
      %p128 = scmp.ne.s32.totalorder %s113, %s127
      %p129 = scmp.eq.s32.totalorder %s19, 0
      %p130 = por %p128, %p129
      %s132 = sadd.s32 %s131, 1
      %p135 = scmp.eq.s32.totalorder %s13, 2
      %p136 = scmp.ne.s32.totalorder %s131, %s133
      %p137 = scmp.eq.s32.totalorder %s13, 0
      %p138 = por %p136, %p137
      %p139 = scmp.ne.s32.totalorder %s131, %s133
      %p140 = scmp.eq.s32.totalorder %s18, 2
      %p141 = por %p139, %p140
      %p142 = scmp.ne.s32.totalorder %s133, %s134
      %p143 = scmp.eq.s32.totalorder %s18, 0
      %p144 = por %p142, %p143
      %p145 = scmp.ne.s32.totalorder %s133, %s134
      %p146 = scmp.eq.s32.totalorder %s19, 2
      %p147 = por %p145, %p146
      %p149 = scmp.ne.s32.totalorder %s134, %s148
      %p150 = scmp.eq.s32.totalorder %s19, 0
      %p151 = por %p149, %p150
      %s153 = sadd.s32 %s152, 1
      %p156 = scmp.eq.s32.totalorder %s13, 2
      %p157 = scmp.ne.s32.totalorder %s152, %s154
      %p158 = scmp.eq.s32.totalorder %s13, 0
      %p159 = por %p157, %p158
      %p160 = scmp.ne.s32.totalorder %s152, %s154
      %p161 = scmp.eq.s32.totalorder %s18, 2
      %p162 = por %p160, %p161
      %p163 = scmp.ne.s32.totalorder %s154, %s155
      %p164 = scmp.eq.s32.totalorder %s18, 0
      %p165 = por %p163, %p164
      %p166 = scmp.ne.s32.totalorder %s154, %s155
      %p167 = scmp.eq.s32.totalorder %s19, 2
      %p168 = por %p166, %p167
      %p170 = scmp.ne.s32.totalorder %s155, %s169
      %p171 = scmp.eq.s32.totalorder %s19, 0
      %p172 = por %p170, %p171
      %s173 = ssub.s32 %s13, %s20
      %p174 = scmp.eq.s32.totalorder %s173, 0
      %s176 = sadd.s32 %s175, 1
      %s177 = scalar_select %p174, %s175, %s176
      %p180 = pneg %p174
      %p181 = scmp.eq.s32.totalorder %s13, 2
      %p182 = por %p180, %p181
      %p183 = scmp.ne.s32.totalorder %s175, %s178
      %p184 = scmp.eq.s32.totalorder %s13, 0
      %p185 = por %p183, %p184
      %p186 = scmp.ne.s32.totalorder %s175, %s178
      %p187 = scmp.eq.s32.totalorder %s18, 2
      %p188 = por %p186, %p187
      %p189 = scmp.ne.s32.totalorder %s178, %s179
      %p190 = scmp.eq.s32.totalorder %s18, 0
      %p191 = por %p189, %p190
      %p192 = scmp.ne.s32.totalorder %s178, %s179
      %p193 = scmp.eq.s32.totalorder %s19, 2
      %p194 = por %p192, %p193
      %p196 = scmp.ne.s32.totalorder %s179, %s195
      %p197 = scmp.eq.s32.totalorder %s19, 0
      %p198 = por %p196, %p197
      %p199 = scmp.le.s32.totalorder 1, %s13
      %p200 = scmp.lt.s32.totalorder %s13, 4
      %p201 = pnand %p199, %p200
      %p202 = pneg %p201
      // Predicated region
      $region9: #{tpu_custom_call.1} parent=5 // pred_check
        _
      $region10: #{tpu_custom_call.1} parent=5 // pred_check_branch
        %204 = sbr.rel (%p201) target = $region12
      $region11: #{tpu_custom_call.1} parent=5 // pred_region
        %s205 = ssub.s32 %s13, 1
        // Predicated region
        $region13: #{tpu_custom_call.1} parent=11 // pred_check
          %p206 = pneg %p60
        $region14: #{tpu_custom_call.1} parent=11 // pred_check_branch
          %208 = sbr.rel (%p206) target = $region16
        $region15: #{tpu_custom_call.1} parent=11 // pred_region
          _
        $region16: #{tpu_custom_call.1} parent=11 // pred_fallthru
          _
        // Predicated region
        $region17: #{tpu_custom_call.1} parent=11 // pred_check
          %p209 = pneg %p81
        $region18: #{tpu_custom_call.1} parent=11 // pred_check_branch
          %211 = sbr.rel (%p209) target = $region20
        $region19: #{tpu_custom_call.1} parent=11 // pred_region
          _
        $region20: #{tpu_custom_call.1} parent=11 // pred_fallthru
          _
        // Predicated region
        $region21: #{tpu_custom_call.1} parent=11 // pred_check
          %p212 = pneg %p102
        $region22: #{tpu_custom_call.1} parent=11 // pred_check_branch
          %214 = sbr.rel (%p212) target = $region24
        $region23: #{tpu_custom_call.1} parent=11 // pred_region
          _
        $region24: #{tpu_custom_call.1} parent=11 // pred_fallthru
          _
        // Predicated region
        $region25: #{tpu_custom_call.1} parent=11 // pred_check
          %p215 = pneg %p123
        $region26: #{tpu_custom_call.1} parent=11 // pred_check_branch
          %217 = sbr.rel (%p215) target = $region28
        $region27: #{tpu_custom_call.1} parent=11 // pred_region
          _
        $region28: #{tpu_custom_call.1} parent=11 // pred_fallthru
          _
        // Predicated region
        $region29: #{tpu_custom_call.1} parent=11 // pred_check
          %p218 = pneg %p144
        $region30: #{tpu_custom_call.1} parent=11 // pred_check_branch
          %220 = sbr.rel (%p218) target = $region32
        $region31: #{tpu_custom_call.1} parent=11 // pred_region
          _
        $region32: #{tpu_custom_call.1} parent=11 // pred_fallthru
          _
        // Predicated region
        $region33: #{tpu_custom_call.1} parent=11 // pred_check
          %p221 = pneg %p165
        $region34: #{tpu_custom_call.1} parent=11 // pred_check_branch
          %223 = sbr.rel (%p221) target = $region36
        $region35: #{tpu_custom_call.1} parent=11 // pred_region
          _
        $region36: #{tpu_custom_call.1} parent=11 // pred_fallthru
          _
      $region12: #{tpu_custom_call.1} parent=5 // pred_fallthru
        _
      %p224 = scmp.lt.s32.totalorder %s13, 3
      // Predicated region
      $region37: #{tpu_custom_call.1} parent=5 // pred_check
        %p225 = pneg %p224
      $region38: #{tpu_custom_call.1} parent=5 // pred_check_branch
        %227 = sbr.rel (%p225) target = $region40
      $region39: #{tpu_custom_call.1} parent=5 // pred_region
        // Predicated region
        $region41: #{tpu_custom_call.1} parent=39 // pred_check
          %p228 = pneg %p33
        $region42: #{tpu_custom_call.1} parent=39 // pred_check_branch
          %230 = sbr.rel (%p228) target = $region44
        $region43: #{tpu_custom_call.1} parent=39 // pred_region
          %s231 = smul.u32 12, %s13
          %s232 = ssub.s32 32, %s231
          %p233 = scmp.lt.s32.totalorder %s232, 12
          %s234 = scalar_select %p233, %s232, 12
          %s235 = smul.u32 128, %s234
          %p236 = scmp.lt.s32.totalorder %s231, 31
          %s237 = scalar_select %p236, %s231, 31
          %s238 = smul.addr %s237, 8
          %s239 = scalar_lea.vmem %s0, %s238
          %s240 = smul.u32 12, %s13
          %s241 = ssub.s32 32, %s240
          %p242 = scmp.lt.s32.totalorder %s241, 12
          %s243 = scalar_select %p242, %s241, 12
          %s244 = smul.u32 128, %s243
        $region44: #{tpu_custom_call.1} parent=39 // pred_fallthru
          _
      $region40: #{tpu_custom_call.1} parent=5 // pred_fallthru
        _
      %p245 = scmp.le.s32.totalorder 1, %s13
      %p246 = scmp.lt.s32.totalorder %s13, 4
      %p247 = pnand %p245, %p246
      %p248 = pneg %p247
      // Predicated region
      $region45: #{tpu_custom_call.1} parent=5 // pred_check
        _
      $region46: #{tpu_custom_call.1} parent=5 // pred_check_branch
        %250 = sbr.rel (%p247) target = $region48
      $region47: #{tpu_custom_call.1} parent=5 // pred_region
        %s251 = ssub.s32 %s13, 1
        %s252 = smul.u32 12, %s18
        %s253 = ssub.s32 32, %s252
        %p254 = scmp.lt.s32.totalorder %s253, 12
        %s255 = scalar_select %p254, %s253, 12
        %s256 = smul.u32 128, %s255
        %p257 = scmp.lt.s32.totalorder %s252, 31
        %s258 = scalar_select %p257, %s252, 31
        %s259 = smul.addr %s258, 8
        %s260 = scalar_lea.vmem %s0, %s259
        %p261 = pneg %p39
        %p262 = pneg %p36
        %p263 = pneg %p60
        %p264 = pneg %p57
        %p265 = pneg %p81
        %p266 = pneg %p78
        %p267 = pneg %p102
        %p268 = pneg %p99
        %p269 = pneg %p123
        %p270 = pneg %p120
        %p271 = pneg %p144
        %p272 = pneg %p141
        %p273 = pneg %p165
        %p274 = pneg %p162
        %p275 = pneg %p191
        %p276 = pneg %p188
        %s277 = sand.u32 %s178, 1
        %s278 = sand.u32 %s178, 1
        %s279 = smul.addr %s278, 96
        %s280 = scalar_lea.vmem [#allocation2], %s279
        %s281 = smul.u32 12, %s18
        %s282 = ssub.s32 32, %s281
        %p283 = scmp.lt.s32.totalorder %s282, 12
        %s284 = scalar_select %p283, %s282, 12
        %s285 = smul.u32 128, %s284
        %p286 = scmp.lt.s32.totalorder %s281, 31
        %s287 = scalar_select %p286, %s281, 31
        %s288 = smul.addr %s287, 8
        %s289 = scalar_lea.vmem %s0, %s288
        %s290 = smul.u32 12, %s18
        %s291 = ssub.s32 32, %s290
        %p292 = scmp.lt.s32.totalorder %s291, 12
        %s293 = scalar_select %p292, %s291, 12
        %s294 = smul.u32 128, %s293
        %s295 = smul.u32 12, %s18
        %s296 = ssub.s32 32, %s295
        %p297 = scmp.lt.s32.totalorder %s296, 12
        %s298 = scalar_select %p297, %s296, 12
        %s299 = smul.u32 128, %s298
        %v300 = vld [vmem:[%s289] sm:$0xff]
        %v301 = vld [vmem:[%s289 + $0x8] sm:$0xff]
        %v302 = vld [vmem:[%s289 + $0x10] sm:$0xff]
        %v303 = vld [vmem:[%s289 + $0x18] sm:$0xff]
        %v304 = vld [vmem:[%s289 + $0x20] sm:$0xff]
        %v305 = vld [vmem:[%s289 + $0x28] sm:$0xff]
        %v306 = vld [vmem:[%s289 + $0x30] sm:$0xff]
        %v307 = vld [vmem:[%s289 + $0x38] sm:$0xff]
        %v308 = vld [vmem:[%s289 + $0x40] sm:$0xff]
        %v309 = vld [vmem:[%s289 + $0x48] sm:$0xff]
        %v310 = vld [vmem:[%s289 + $0x50] sm:$0xff]
        %v311 = vld [vmem:[%s289 + $0x58] sm:$0xff]
        %v312 = vld [vmem:[%s1] sm:$0xff]
        %v313 = vld [vmem:[%s1 + $0x8] sm:$0xff]
        %v314 = vld [vmem:[%s1 + $0x10] sm:$0xff]
        %v315 = vld [vmem:[%s1 + $0x18] sm:$0xff]
        %v316 = vld [vmem:[%s2] sm:$0x1]
        %v318 = vlaneseq
        %v319 = vshrl.u32 %v318, 7
        %v320 = vsub.s32 0, %v319
        %v321 = vrot.slane %v316, %v320
        %vm323 = vcmask 261120
        %v325 = vsel %vm323, %v300, 0
        %v328 = vsel %vm323, %v301, 0
        %v331 = vsel %vm323, %v302, 0
        %v334 = vsel %vm323, %v303, 0
        %v337 = vsel %vm323, %v304, 0
        %v340 = vsel %vm323, %v305, 0
        %v343 = vsel %vm323, %v306, 0
        %v346 = vsel %vm323, %v307, 0
        %v349 = vsel %vm323, %v308, 0
        %v352 = vsel %vm323, %v309, 0
        %v355 = vsel %vm323, %v310, 0
        %v358 = vsel %vm323, %v311, 0
        %360 = vmatprep.subr.mxu0 0.0
        %361 = vmatpush1.msra.mxu0 %v312
        %362 = vmatprep.subr.mxu0 0.0
        %363 = vmatpush1.msra.mxu0 %v313
        %364 = vmatprep.subr.mxu0 0.0
        %365 = vmatpush1.msra.mxu0 %v314
        %366 = vmatprep.subr.mxu0 0.0
        %367 = vmatpush1.msra.mxu0 %v315
        %368 = vmatprep.subr.mxu0 0.0
        %369 = vmatpush1.msra.mxu0 0.0
        %370 = vmatprep.subr.mxu0 0.0
        %371 = vmatpush1.msra.mxu0 0.0
        %372 = vmatprep.subr.mxu0 0.0
        %373 = vmatpush1.msra.mxu0 0.0
        %374 = vmatprep.subr.mxu0 0.0
        %375 = vmatpush1.msra.mxu0 0.0
        %376 = vmatprep.subr.mxu0 0.0
        %377 = vmatpush1.msra.mxu0 0.0
        %378 = vmatprep.subr.mxu0 0.0
        %379 = vmatpush1.msra.mxu0 0.0
        %380 = vmatprep.subr.mxu0 0.0
        %381 = vmatpush1.msra.mxu0 0.0
        %382 = vmatprep.subr.mxu0 0.0
        %383 = vmatpush1.msra.mxu0 0.0
        %384 = vmatprep.subr.mxu0 0.0
        %385 = vmatpush1.msra.mxu0 0.0
        %386 = vmatprep.subr.mxu0 0.0
        %387 = vmatpush1.msra.mxu0 0.0
        %388 = vmatprep.subr.mxu0 0.0
        %389 = vmatpush1.msra.mxu0 0.0
        %390 = vmatprep.subr.mxu0 0.0
        %391 = vmatpush1.msra.mxu0 0.0
        %392 = vmatprep.subr.mxu0 0.0
        %393 = vmatpush1.msra.mxu0 0.0
        %394 = vmatprep.subr.mxu0 0.0
        %395 = vmatpush1.msra.mxu0 0.0
        %396 = vmatprep.subr.mxu0 0.0
        %397 = vmatpush1.msra.mxu0 0.0
        %398 = vmatprep.subr.mxu0 0.0
        %399 = vmatpush1.msra.mxu0 0.0
        %400 = vmatprep.subr.mxu0 0.0
        %401 = vmatpush1.msra.mxu0 0.0
        %402 = vmatprep.subr.mxu0 0.0
        %403 = vmatpush1.msra.mxu0 0.0
        %404 = vmatprep.subr.mxu0 0.0
        %405 = vmatpush1.msra.mxu0 0.0
        %406 = vmatprep.subr.mxu0 0.0
        %407 = vmatpush1.msra.mxu0 0.0
        %408 = vmatprep.subr.mxu0 0.0
        %409 = vmatpush1.msra.mxu0 0.0
        %410 = vmatprep.subr.mxu0 0.0
        %411 = vmatpush1.msra.mxu0 0.0
        %412 = vmatprep.subr.mxu0 0.0
        %413 = vmatpush1.msra.mxu0 0.0
        %414 = vmatprep.subr.mxu0 0.0
        %415 = vmatpush1.msra.mxu0 0.0
        %416 = vmatprep.subr.mxu0 0.0
        %417 = vmatpush1.msra.mxu0 0.0
        %418 = vmatprep.subr.mxu0 0.0
        %419 = vmatpush1.msra.mxu0 0.0
        %420 = vmatprep.subr.mxu0 0.0
        %421 = vmatpush1.msra.mxu0 0.0
        %422 = vmatprep.subr.mxu0 0.0
        %423 = vmatpush1.msra.mxu0 0.0
        %424 = vmatprep.mubr.f32.mxu0 0.0
        %425 = vmatmul.mubr.f32.gmra.mrb[0].mxu0 %v325
        %v426 = vpop.f32.mrb[0].mxu0
        %v427 = vadd.f32 %v321, %v426
        %v428 = vpop.f32.mrb[0].mxu0
        %429 = vmatprep.mubr.f32.mxu0 0.0
        %430 = vmatmul.mubr.f32.gmra.mrb[0].mxu0 %v328
        %v431 = vpop.f32.mrb[0].mxu0
        %v432 = vadd.f32 %v321, %v431
        %v433 = vpop.f32.mrb[0].mxu0
        %434 = vmatprep.mubr.f32.mxu0 0.0
        %435 = vmatmul.mubr.f32.gmra.mrb[0].mxu0 %v331
        %v436 = vpop.f32.mrb[0].mxu0
        %v437 = vadd.f32 %v321, %v436
        %v438 = vpop.f32.mrb[0].mxu0
        %439 = vmatprep.mubr.f32.mxu0 0.0
        %440 = vmatmul.mubr.f32.gmra.mrb[0].mxu0 %v334
        %v441 = vpop.f32.mrb[0].mxu0
        %v442 = vadd.f32 %v321, %v441
        %v443 = vpop.f32.mrb[0].mxu0
        %444 = vmatprep.mubr.f32.mxu0 0.0
        %445 = vmatmul.mubr.f32.gmra.mrb[0].mxu0 %v337
        %v446 = vpop.f32.mrb[0].mxu0
        %v447 = vadd.f32 %v321, %v446
        %v448 = vpop.f32.mrb[0].mxu0
        %449 = vmatprep.mubr.f32.mxu0 0.0
        %450 = vmatmul.mubr.f32.gmra.mrb[0].mxu0 %v340
        %v451 = vpop.f32.mrb[0].mxu0
        %v452 = vadd.f32 %v321, %v451
        %v453 = vpop.f32.mrb[0].mxu0
        %454 = vmatprep.mubr.f32.mxu0 0.0
        %455 = vmatmul.mubr.f32.gmra.mrb[0].mxu0 %v343
        %v456 = vpop.f32.mrb[0].mxu0
        %v457 = vadd.f32 %v321, %v456
        %v458 = vpop.f32.mrb[0].mxu0
        %459 = vmatprep.mubr.f32.mxu0 0.0
        %460 = vmatmul.mubr.f32.gmra.mrb[0].mxu0 %v346
        %v461 = vpop.f32.mrb[0].mxu0
        %v462 = vadd.f32 %v321, %v461
        %v463 = vpop.f32.mrb[0].mxu0
        %464 = vmatprep.mubr.f32.mxu0 0.0
        %465 = vmatmul.mubr.f32.gmra.mrb[0].mxu0 %v349
        %v466 = vpop.f32.mrb[0].mxu0
        %v467 = vadd.f32 %v321, %v466
        %v468 = vpop.f32.mrb[0].mxu0
        %469 = vmatprep.mubr.f32.mxu0 0.0
        %470 = vmatmul.mubr.f32.gmra.mrb[0].mxu0 %v352
        %v471 = vpop.f32.mrb[0].mxu0
        %v472 = vadd.f32 %v321, %v471
        %v473 = vpop.f32.mrb[0].mxu0
        %474 = vmatprep.mubr.f32.mxu0 0.0
        %475 = vmatmul.mubr.f32.gmra.mrb[0].mxu0 %v355
        %v476 = vpop.f32.mrb[0].mxu0
        %v477 = vadd.f32 %v321, %v476
        %v478 = vpop.f32.mrb[0].mxu0
        %479 = vmatprep.mubr.f32.mxu0 0.0
        %480 = vmatmul.mubr.f32.gmra.mrb[0].mxu0 %v358
        %v481 = vpop.f32.mrb[0].mxu0
        %v482 = vadd.f32 %v321, %v481
        %v483 = vpop.f32.mrb[0].mxu0
        %484 = vdwg.mxu0
        %v485 = vld [vmem:[%s3] sm:$0xff]
        %v486 = vld [vmem:[%s3 + $0x8] sm:$0xff]
        %v487 = vld [vmem:[%s3 + $0x10] sm:$0xff]
        %v488 = vld [vmem:[%s3 + $0x18] sm:$0xff]
        %v489 = vld [vmem:[%s4] sm:$0x1]
        %v491 = vlaneseq
        %v492 = vshrl.u32 %v491, 7
        %v493 = vsub.s32 0, %v492
        %v494 = vrot.slane %v489, %v493
        %496 = vmatprep.subr.mxu0 0.0
        %497 = vmatpush1.msra.mxu0 %v485
        %498 = vmatprep.subr.mxu0 0.0
        %499 = vmatpush1.msra.mxu0 %v486
        %500 = vmatprep.subr.mxu0 0.0
        %501 = vmatpush1.msra.mxu0 %v487
        %502 = vmatprep.subr.mxu0 0.0
        %503 = vmatpush1.msra.mxu0 %v488
        %504 = vmatprep.subr.mxu0 0.0
        %505 = vmatpush1.msra.mxu0 0.0
        %506 = vmatprep.subr.mxu0 0.0
        %507 = vmatpush1.msra.mxu0 0.0
        %508 = vmatprep.subr.mxu0 0.0
        %509 = vmatpush1.msra.mxu0 0.0
        %510 = vmatprep.subr.mxu0 0.0
        %511 = vmatpush1.msra.mxu0 0.0
        %512 = vmatprep.subr.mxu0 0.0
        %513 = vmatpush1.msra.mxu0 0.0
        %514 = vmatprep.subr.mxu0 0.0
        %515 = vmatpush1.msra.mxu0 0.0
        %516 = vmatprep.subr.mxu0 0.0
        %517 = vmatpush1.msra.mxu0 0.0
        %518 = vmatprep.subr.mxu0 0.0
        %519 = vmatpush1.msra.mxu0 0.0
        %520 = vmatprep.subr.mxu0 0.0
        %521 = vmatpush1.msra.mxu0 0.0
        %522 = vmatprep.subr.mxu0 0.0
        %523 = vmatpush1.msra.mxu0 0.0
        %524 = vmatprep.subr.mxu0 0.0
        %525 = vmatpush1.msra.mxu0 0.0
        %526 = vmatprep.subr.mxu0 0.0
        %527 = vmatpush1.msra.mxu0 0.0
        %528 = vmatprep.subr.mxu0 0.0
        %529 = vmatpush1.msra.mxu0 0.0
        %530 = vmatprep.subr.mxu0 0.0
        %531 = vmatpush1.msra.mxu0 0.0
        %532 = vmatprep.subr.mxu0 0.0
        %533 = vmatpush1.msra.mxu0 0.0
        %534 = vmatprep.subr.mxu0 0.0
        %535 = vmatpush1.msra.mxu0 0.0
        %536 = vmatprep.subr.mxu0 0.0
        %537 = vmatpush1.msra.mxu0 0.0
        %538 = vmatprep.subr.mxu0 0.0
        %539 = vmatpush1.msra.mxu0 0.0
        %540 = vmatprep.subr.mxu0 0.0
        %541 = vmatpush1.msra.mxu0 0.0
        %542 = vmatprep.subr.mxu0 0.0
        %543 = vmatpush1.msra.mxu0 0.0
        %544 = vmatprep.subr.mxu0 0.0
        %545 = vmatpush1.msra.mxu0 0.0
        %546 = vmatprep.subr.mxu0 0.0
        %547 = vmatpush1.msra.mxu0 0.0
        %548 = vmatprep.subr.mxu0 0.0
        %549 = vmatpush1.msra.mxu0 0.0
        %550 = vmatprep.subr.mxu0 0.0
        %551 = vmatpush1.msra.mxu0 0.0
        %552 = vmatprep.subr.mxu0 0.0
        %553 = vmatpush1.msra.mxu0 0.0
        %554 = vmatprep.subr.mxu0 0.0
        %555 = vmatpush1.msra.mxu0 0.0
        %556 = vmatprep.subr.mxu0 0.0
        %557 = vmatpush1.msra.mxu0 0.0
        %558 = vmatprep.subr.mxu0 0.0
        %559 = vmatpush1.msra.mxu0 0.0
        %560 = vmatprep.mubr.f32.mxu0 0.0
        %561 = vmatmul.mubr.f32.gmra.mrb[0].mxu0 %v325
        %v562 = vpop.f32.mrb[0].mxu0
        %v563 = vadd.f32 %v494, %v562
        %v564 = vpop.f32.mrb[0].mxu0
        %565 = vmatprep.mubr.f32.mxu0 0.0
        %566 = vmatmul.mubr.f32.gmra.mrb[0].mxu0 %v328
        %v567 = vpop.f32.mrb[0].mxu0
        %v568 = vadd.f32 %v494, %v567
        %v569 = vpop.f32.mrb[0].mxu0
        %570 = vmatprep.mubr.f32.mxu0 0.0
        %571 = vmatmul.mubr.f32.gmra.mrb[0].mxu0 %v331
        %v572 = vpop.f32.mrb[0].mxu0
        %v573 = vadd.f32 %v494, %v572
        %v574 = vpop.f32.mrb[0].mxu0
        %575 = vmatprep.mubr.f32.mxu0 0.0
        %576 = vmatmul.mubr.f32.gmra.mrb[0].mxu0 %v334
        %v577 = vpop.f32.mrb[0].mxu0
        %v578 = vadd.f32 %v494, %v577
        %v579 = vpop.f32.mrb[0].mxu0
        %580 = vmatprep.mubr.f32.mxu0 0.0
        %581 = vmatmul.mubr.f32.gmra.mrb[0].mxu0 %v337
        %v582 = vpop.f32.mrb[0].mxu0
        %v583 = vadd.f32 %v494, %v582
        %v584 = vpop.f32.mrb[0].mxu0
        %585 = vmatprep.mubr.f32.mxu0 0.0
        %586 = vmatmul.mubr.f32.gmra.mrb[0].mxu0 %v340
        %v587 = vpop.f32.mrb[0].mxu0
        %v588 = vadd.f32 %v494, %v587
        %v589 = vpop.f32.mrb[0].mxu0
        %590 = vmatprep.mubr.f32.mxu0 0.0
        %591 = vmatmul.mubr.f32.gmra.mrb[0].mxu0 %v343
        %v592 = vpop.f32.mrb[0].mxu0
        %v593 = vadd.f32 %v494, %v592
        %v594 = vpop.f32.mrb[0].mxu0
        %595 = vmatprep.mubr.f32.mxu0 0.0
        %596 = vmatmul.mubr.f32.gmra.mrb[0].mxu0 %v346
        %v597 = vpop.f32.mrb[0].mxu0
        %v598 = vadd.f32 %v494, %v597
        %v599 = vpop.f32.mrb[0].mxu0
        %600 = vmatprep.mubr.f32.mxu0 0.0
        %601 = vmatmul.mubr.f32.gmra.mrb[0].mxu0 %v349
        %v602 = vpop.f32.mrb[0].mxu0
        %v603 = vadd.f32 %v494, %v602
        %v604 = vpop.f32.mrb[0].mxu0
        %605 = vmatprep.mubr.f32.mxu0 0.0
        %606 = vmatmul.mubr.f32.gmra.mrb[0].mxu0 %v352
        %v607 = vpop.f32.mrb[0].mxu0
        %v608 = vadd.f32 %v494, %v607
        %v609 = vpop.f32.mrb[0].mxu0
        %610 = vmatprep.mubr.f32.mxu0 0.0
        %611 = vmatmul.mubr.f32.gmra.mrb[0].mxu0 %v355
        %v612 = vpop.f32.mrb[0].mxu0
        %v613 = vadd.f32 %v494, %v612
        %v614 = vpop.f32.mrb[0].mxu0
        %615 = vmatprep.mubr.f32.mxu0 0.0
        %616 = vmatmul.mubr.f32.gmra.mrb[0].mxu0 %v358
        %v617 = vpop.f32.mrb[0].mxu0
        %v618 = vadd.f32 %v494, %v617
        %v619 = vpop.f32.mrb[0].mxu0
        %620 = vdwg.mxu0
        %v621 = vmul.f32 %v427, 0.5
        %v622 = vmul.f32 %v432, 0.5
        %v623 = vmul.f32 %v437, 0.5
        %v624 = vmul.f32 %v442, 0.5
        %v625 = vmul.f32 %v447, 0.5
        %v626 = vmul.f32 %v452, 0.5
        %v627 = vmul.f32 %v457, 0.5
        %v628 = vmul.f32 %v462, 0.5
        %v629 = vmul.f32 %v467, 0.5
        %v630 = vmul.f32 %v472, 0.5
        %v631 = vmul.f32 %v477, 0.5
        %v632 = vmul.f32 %v482, 0.5
        %v633 = vmul.f32 %v427, 0.70710677
        %v634 = vmul.f32 %v432, 0.70710677
        %v635 = vmul.f32 %v437, 0.70710677
        %v636 = vmul.f32 %v442, 0.70710677
        %v637 = vmul.f32 %v447, 0.70710677
        %v638 = vmul.f32 %v452, 0.70710677
        %v639 = vmul.f32 %v457, 0.70710677
        %v640 = vmul.f32 %v462, 0.70710677
        %v641 = vmul.f32 %v467, 0.70710677
        %v642 = vmul.f32 %v472, 0.70710677
        %v643 = vmul.f32 %v477, 0.70710677
        %v644 = vmul.f32 %v482, 0.70710677
        %v645 = vand.u32 2147483647, %v633
        %v646 = vand.u32 2147483647, %v634
        %v647 = vand.u32 2147483647, %v635
        %v648 = vand.u32 2147483647, %v636
        %v649 = vand.u32 2147483647, %v637
        %v650 = vand.u32 2147483647, %v638
        %v651 = vand.u32 2147483647, %v639
        %v652 = vand.u32 2147483647, %v640
        %v653 = vand.u32 2147483647, %v641
        %v654 = vand.u32 2147483647, %v642
        %v655 = vand.u32 2147483647, %v643
        %v656 = vand.u32 2147483647, %v644
        %v657 = vmul.f32 %v645, 0.3275911
        %v658 = vmul.f32 %v646, 0.3275911
        %v659 = vmul.f32 %v647, 0.3275911
        %v660 = vmul.f32 %v648, 0.3275911
        %v661 = vmul.f32 %v649, 0.3275911
        %v662 = vmul.f32 %v650, 0.3275911
        %v663 = vmul.f32 %v651, 0.3275911
        %v664 = vmul.f32 %v652, 0.3275911
        %v665 = vmul.f32 %v653, 0.3275911
        %v666 = vmul.f32 %v654, 0.3275911
        %v667 = vmul.f32 %v655, 0.3275911
        %v668 = vmul.f32 %v656, 0.3275911
        %v669 = vadd.f32 %v657, 1.0
        %v670 = vadd.f32 %v658, 1.0
        %v671 = vadd.f32 %v659, 1.0
        %v672 = vadd.f32 %v660, 1.0
        %v673 = vadd.f32 %v661, 1.0
        %v674 = vadd.f32 %v662, 1.0
        %v675 = vadd.f32 %v663, 1.0
        %v676 = vadd.f32 %v664, 1.0
        %v677 = vadd.f32 %v665, 1.0
        %v678 = vadd.f32 %v666, 1.0
        %v679 = vadd.f32 %v667, 1.0
        %v680 = vadd.f32 %v668, 1.0
        %v681 = vrcp.pop %v669
        %v682 = vmul.f32 1.0, %v681
        %v683 = vrcp.pop %v670
        %v684 = vmul.f32 1.0, %v683
        %v685 = vrcp.pop %v671
        %v686 = vmul.f32 1.0, %v685
        %v687 = vrcp.pop %v672
        %v688 = vmul.f32 1.0, %v687
        %v689 = vrcp.pop %v673
        %v690 = vmul.f32 1.0, %v689
        %v691 = vrcp.pop %v674
        %v692 = vmul.f32 1.0, %v691
        %v693 = vrcp.pop %v675
        %v694 = vmul.f32 1.0, %v693
        %v695 = vrcp.pop %v676
        %v696 = vmul.f32 1.0, %v695
        %v697 = vrcp.pop %v677
        %v698 = vmul.f32 1.0, %v697
        %v699 = vrcp.pop %v678
        %v700 = vmul.f32 1.0, %v699
        %v701 = vrcp.pop %v679
        %v702 = vmul.f32 1.0, %v701
        %v703 = vrcp.pop %v680
        %v704 = vmul.f32 1.0, %v703
        %v705 = vmul.f32 %v682, 1.0614054
        %v706 = vmul.f32 %v684, 1.0614054
        %v707 = vmul.f32 %v686, 1.0614054
        %v708 = vmul.f32 %v688, 1.0614054
        %v709 = vmul.f32 %v690, 1.0614054
        %v710 = vmul.f32 %v692, 1.0614054
        %v711 = vmul.f32 %v694, 1.0614054
        %v712 = vmul.f32 %v696, 1.0614054
        %v713 = vmul.f32 %v698, 1.0614054
        %v714 = vmul.f32 %v700, 1.0614054
        %v715 = vmul.f32 %v702, 1.0614054
        %v716 = vmul.f32 %v704, 1.0614054
        %v717 = vadd.f32 %v705, -1.4531521
        %v718 = vadd.f32 %v706, -1.4531521
        %v719 = vadd.f32 %v707, -1.4531521
        %v720 = vadd.f32 %v708, -1.4531521
        %v721 = vadd.f32 %v709, -1.4531521
        %v722 = vadd.f32 %v710, -1.4531521
        %v723 = vadd.f32 %v711, -1.4531521
        %v724 = vadd.f32 %v712, -1.4531521
        %v725 = vadd.f32 %v713, -1.4531521
        %v726 = vadd.f32 %v714, -1.4531521
        %v727 = vadd.f32 %v715, -1.4531521
        %v728 = vadd.f32 %v716, -1.4531521
        %v729 = vmul.f32 %v717, %v682
        %v730 = vmul.f32 %v718, %v684
        %v731 = vmul.f32 %v719, %v686
        %v732 = vmul.f32 %v720, %v688
        %v733 = vmul.f32 %v721, %v690
        %v734 = vmul.f32 %v722, %v692
        %v735 = vmul.f32 %v723, %v694
        %v736 = vmul.f32 %v724, %v696
        %v737 = vmul.f32 %v725, %v698
        %v738 = vmul.f32 %v726, %v700
        %v739 = vmul.f32 %v727, %v702
        %v740 = vmul.f32 %v728, %v704
        %v741 = vadd.f32 %v729, 1.4214138
        %v742 = vadd.f32 %v730, 1.4214138
        %v743 = vadd.f32 %v731, 1.4214138
        %v744 = vadd.f32 %v732, 1.4214138
        %v745 = vadd.f32 %v733, 1.4214138
        %v746 = vadd.f32 %v734, 1.4214138
        %v747 = vadd.f32 %v735, 1.4214138
        %v748 = vadd.f32 %v736, 1.4214138
        %v749 = vadd.f32 %v737, 1.4214138
        %v750 = vadd.f32 %v738, 1.4214138
        %v751 = vadd.f32 %v739, 1.4214138
        %v752 = vadd.f32 %v740, 1.4214138
        %v753 = vmul.f32 %v741, %v682
        %v754 = vmul.f32 %v742, %v684
        %v755 = vmul.f32 %v743, %v686
        %v756 = vmul.f32 %v744, %v688
        %v757 = vmul.f32 %v745, %v690
        %v758 = vmul.f32 %v746, %v692
        %v759 = vmul.f32 %v747, %v694
        %v760 = vmul.f32 %v748, %v696
        %v761 = vmul.f32 %v749, %v698
        %v762 = vmul.f32 %v750, %v700
        %v763 = vmul.f32 %v751, %v702
        %v764 = vmul.f32 %v752, %v704
        %v765 = vadd.f32 %v753, -0.28449672
        %v766 = vadd.f32 %v754, -0.28449672
        %v767 = vadd.f32 %v755, -0.28449672
        %v768 = vadd.f32 %v756, -0.28449672
        %v769 = vadd.f32 %v757, -0.28449672
        %v770 = vadd.f32 %v758, -0.28449672
        %v771 = vadd.f32 %v759, -0.28449672
        %v772 = vadd.f32 %v760, -0.28449672
        %v773 = vadd.f32 %v761, -0.28449672
        %v774 = vadd.f32 %v762, -0.28449672
        %v775 = vadd.f32 %v763, -0.28449672
        %v776 = vadd.f32 %v764, -0.28449672
        %v777 = vmul.f32 %v765, %v682
        %v778 = vmul.f32 %v766, %v684
        %v779 = vmul.f32 %v767, %v686
        %v780 = vmul.f32 %v768, %v688
        %v781 = vmul.f32 %v769, %v690
        %v782 = vmul.f32 %v770, %v692
        %v783 = vmul.f32 %v771, %v694
        %v784 = vmul.f32 %v772, %v696
        %v785 = vmul.f32 %v773, %v698
        %v786 = vmul.f32 %v774, %v700
        %v787 = vmul.f32 %v775, %v702
        %v788 = vmul.f32 %v776, %v704
        %v789 = vadd.f32 %v777, 0.2548296
        %v790 = vadd.f32 %v778, 0.2548296
        %v791 = vadd.f32 %v779, 0.2548296
        %v792 = vadd.f32 %v780, 0.2548296
        %v793 = vadd.f32 %v781, 0.2548296
        %v794 = vadd.f32 %v782, 0.2548296
        %v795 = vadd.f32 %v783, 0.2548296
        %v796 = vadd.f32 %v784, 0.2548296
        %v797 = vadd.f32 %v785, 0.2548296
        %v798 = vadd.f32 %v786, 0.2548296
        %v799 = vadd.f32 %v787, 0.2548296
        %v800 = vadd.f32 %v788, 0.2548296
        %v801 = vmul.f32 %v789, %v682
        %v802 = vmul.f32 %v790, %v684
        %v803 = vmul.f32 %v791, %v686
        %v804 = vmul.f32 %v792, %v688
        %v805 = vmul.f32 %v793, %v690
        %v806 = vmul.f32 %v794, %v692
        %v807 = vmul.f32 %v795, %v694
        %v808 = vmul.f32 %v796, %v696
        %v809 = vmul.f32 %v797, %v698
        %v810 = vmul.f32 %v798, %v700
        %v811 = vmul.f32 %v799, %v702
        %v812 = vmul.f32 %v800, %v704
        %v813 = vsub.f32 0.0, %v645
        %v814 = vsub.f32 0.0, %v646
        %v815 = vsub.f32 0.0, %v647
        %v816 = vsub.f32 0.0, %v648
        %v817 = vsub.f32 0.0, %v649
        %v818 = vsub.f32 0.0, %v650
        %v819 = vsub.f32 0.0, %v651
        %v820 = vsub.f32 0.0, %v652
        %v821 = vsub.f32 0.0, %v653
        %v822 = vsub.f32 0.0, %v654
        %v823 = vsub.f32 0.0, %v655
        %v824 = vsub.f32 0.0, %v656
        %v825 = vmul.f32 %v813, %v645
        %v826 = vmul.f32 %v814, %v646
        %v827 = vmul.f32 %v815, %v647
        %v828 = vmul.f32 %v816, %v648
        %v829 = vmul.f32 %v817, %v649
        %v830 = vmul.f32 %v818, %v650
        %v831 = vmul.f32 %v819, %v651
        %v832 = vmul.f32 %v820, %v652
        %v833 = vmul.f32 %v821, %v653
        %v834 = vmul.f32 %v822, %v654
        %v835 = vmul.f32 %v823, %v655
        %v836 = vmul.f32 %v824, %v656
        %v837 = vmul.f32 %v825, 1.442695
        %v838 = vpow.pop %v837
        %v839 = vmul.f32 %v826, 1.442695
        %v840 = vpow.pop %v839
        %v841 = vmul.f32 %v827, 1.442695
        %v842 = vpow.pop %v841
        %v843 = vmul.f32 %v828, 1.442695
        %v844 = vpow.pop %v843
        %v845 = vmul.f32 %v829, 1.442695
        %v846 = vpow.pop %v845
        %v847 = vmul.f32 %v830, 1.442695
        %v848 = vpow.pop %v847
        %v849 = vmul.f32 %v831, 1.442695
        %v850 = vpow.pop %v849
        %v851 = vmul.f32 %v832, 1.442695
        %v852 = vpow.pop %v851
        %v853 = vmul.f32 %v833, 1.442695
        %v854 = vpow.pop %v853
        %v855 = vmul.f32 %v834, 1.442695
        %v856 = vpow.pop %v855
        %v857 = vmul.f32 %v835, 1.442695
        %v858 = vpow.pop %v857
        %v859 = vmul.f32 %v836, 1.442695
        %v860 = vpow.pop %v859
        %v861 = vmul.f32 %v801, %v838
        %v862 = vmul.f32 %v802, %v840
        %v863 = vmul.f32 %v803, %v842
        %v864 = vmul.f32 %v804, %v844
        %v865 = vmul.f32 %v805, %v846
        %v866 = vmul.f32 %v806, %v848
        %v867 = vmul.f32 %v807, %v850
        %v868 = vmul.f32 %v808, %v852
        %v869 = vmul.f32 %v809, %v854
        %v870 = vmul.f32 %v810, %v856
        %v871 = vmul.f32 %v811, %v858
        %v872 = vmul.f32 %v812, %v860
        %v873 = vsub.f32 1.0, %v861
        %v874 = vsub.f32 1.0, %v862
        %v875 = vsub.f32 1.0, %v863
        %v876 = vsub.f32 1.0, %v864
        %v877 = vsub.f32 1.0, %v865
        %v878 = vsub.f32 1.0, %v866
        %v879 = vsub.f32 1.0, %v867
        %v880 = vsub.f32 1.0, %v868
        %v881 = vsub.f32 1.0, %v869
        %v882 = vsub.f32 1.0, %v870
        %v883 = vsub.f32 1.0, %v871
        %v884 = vsub.f32 1.0, %v872
        %vm885 = vcmp.lt.f32.partialorder %v633, 0.0
        %vm886 = vcmp.lt.f32.partialorder %v634, 0.0
        %vm887 = vcmp.lt.f32.partialorder %v635, 0.0
        %vm888 = vcmp.lt.f32.partialorder %v636, 0.0
        %vm889 = vcmp.lt.f32.partialorder %v637, 0.0
        %vm890 = vcmp.lt.f32.partialorder %v638, 0.0
        %vm891 = vcmp.lt.f32.partialorder %v639, 0.0
        %vm892 = vcmp.lt.f32.partialorder %v640, 0.0
        %vm893 = vcmp.lt.f32.partialorder %v641, 0.0
        %vm894 = vcmp.lt.f32.partialorder %v642, 0.0
        %vm895 = vcmp.lt.f32.partialorder %v643, 0.0
        %vm896 = vcmp.lt.f32.partialorder %v644, 0.0
        %v897 = vsub.f32 0.0, %v873
        %v898 = vsub.f32 0.0, %v874
        %v899 = vsub.f32 0.0, %v875
        %v900 = vsub.f32 0.0, %v876
        %v901 = vsub.f32 0.0, %v877
        %v902 = vsub.f32 0.0, %v878
        %v903 = vsub.f32 0.0, %v879
        %v904 = vsub.f32 0.0, %v880
        %v905 = vsub.f32 0.0, %v881
        %v906 = vsub.f32 0.0, %v882
        %v907 = vsub.f32 0.0, %v883
        %v908 = vsub.f32 0.0, %v884
        %v909 = vsel %vm885, %v897, %v873
        %v910 = vsel %vm886, %v898, %v874
        %v911 = vsel %vm887, %v899, %v875
        %v912 = vsel %vm888, %v900, %v876
        %v913 = vsel %vm889, %v901, %v877
        %v914 = vsel %vm890, %v902, %v878
        %v915 = vsel %vm891, %v903, %v879
        %v916 = vsel %vm892, %v904, %v880
        %v917 = vsel %vm893, %v905, %v881
        %v918 = vsel %vm894, %v906, %v882
        %v919 = vsel %vm895, %v907, %v883
        %v920 = vsel %vm896, %v908, %v884
        %v921 = vadd.f32 %v909, 1.0
        %v922 = vadd.f32 %v910, 1.0
        %v923 = vadd.f32 %v911, 1.0
        %v924 = vadd.f32 %v912, 1.0
        %v925 = vadd.f32 %v913, 1.0
        %v926 = vadd.f32 %v914, 1.0
        %v927 = vadd.f32 %v915, 1.0
        %v928 = vadd.f32 %v916, 1.0
        %v929 = vadd.f32 %v917, 1.0
        %v930 = vadd.f32 %v918, 1.0
        %v931 = vadd.f32 %v919, 1.0
        %v932 = vadd.f32 %v920, 1.0
        %v933 = vmul.f32 %v621, %v921
        %v934 = vmul.f32 %v622, %v922
        %v935 = vmul.f32 %v623, %v923
        %v936 = vmul.f32 %v624, %v924
        %v937 = vmul.f32 %v625, %v925
        %v938 = vmul.f32 %v626, %v926
        %v939 = vmul.f32 %v627, %v927
        %v940 = vmul.f32 %v628, %v928
        %v941 = vmul.f32 %v629, %v929
        %v942 = vmul.f32 %v630, %v930
        %v943 = vmul.f32 %v631, %v931
        %v944 = vmul.f32 %v632, %v932
        %v945 = vmul.f32 %v933, %v563
        %v946 = vmul.f32 %v934, %v568
        %v947 = vmul.f32 %v935, %v573
        %v948 = vmul.f32 %v936, %v578
        %v949 = vmul.f32 %v937, %v583
        %v950 = vmul.f32 %v938, %v588
        %v951 = vmul.f32 %v939, %v593
        %v952 = vmul.f32 %v940, %v598
        %v953 = vmul.f32 %v941, %v603
        %v954 = vmul.f32 %v942, %v608
        %v955 = vmul.f32 %v943, %v613
        %v956 = vmul.f32 %v944, %v618
        %v957 = vld [vmem:[%s5] sm:$0xff]
        %v958 = vld [vmem:[%s5 + $0x8] sm:$0xff]
        %v959 = vld [vmem:[%s5 + $0x10] sm:$0xff]
        %v960 = vld [vmem:[%s5 + $0x18] sm:$0xff]
        %v961 = vld [vmem:[%s6] sm:$0x1]
        %v963 = vlaneseq
        %v964 = vshrl.u32 %v963, 7
        %v965 = vsub.s32 0, %v964
        %v966 = vrot.slane %v961, %v965
        %v969 = vsel %vm323, %v945, 0
        %v972 = vsel %vm323, %v946, 0
        %v975 = vsel %vm323, %v947, 0
        %v978 = vsel %vm323, %v948, 0
        %v981 = vsel %vm323, %v949, 0
        %v984 = vsel %vm323, %v950, 0
        %v987 = vsel %vm323, %v951, 0
        %v990 = vsel %vm323, %v952, 0
        %v993 = vsel %vm323, %v953, 0
        %v996 = vsel %vm323, %v954, 0
        %v999 = vsel %vm323, %v955, 0
        %v1002 = vsel %vm323, %v956, 0
        %1004 = vmatprep.subr.mxu0 0.0
        %1005 = vmatpush1.msra.mxu0 %v957
        %1006 = vmatprep.subr.mxu0 0.0
        %1007 = vmatpush1.msra.mxu0 %v958
        %1008 = vmatprep.subr.mxu0 0.0
        %1009 = vmatpush1.msra.mxu0 %v959
        %1010 = vmatprep.subr.mxu0 0.0
        %1011 = vmatpush1.msra.mxu0 %v960
        %1012 = vmatprep.subr.mxu0 0.0
        %1013 = vmatpush1.msra.mxu0 0.0
        %1014 = vmatprep.subr.mxu0 0.0
        %1015 = vmatpush1.msra.mxu0 0.0
        %1016 = vmatprep.subr.mxu0 0.0
        %1017 = vmatpush1.msra.mxu0 0.0
        %1018 = vmatprep.subr.mxu0 0.0
        %1019 = vmatpush1.msra.mxu0 0.0
        %1020 = vmatprep.subr.mxu0 0.0
        %1021 = vmatpush1.msra.mxu0 0.0
        %1022 = vmatprep.subr.mxu0 0.0
        %1023 = vmatpush1.msra.mxu0 0.0
        %1024 = vmatprep.subr.mxu0 0.0
        %1025 = vmatpush1.msra.mxu0 0.0
        %1026 = vmatprep.subr.mxu0 0.0
        %1027 = vmatpush1.msra.mxu0 0.0
        %1028 = vmatprep.subr.mxu0 0.0
        %1029 = vmatpush1.msra.mxu0 0.0
        %1030 = vmatprep.subr.mxu0 0.0
        %1031 = vmatpush1.msra.mxu0 0.0
        %1032 = vmatprep.subr.mxu0 0.0
        %1033 = vmatpush1.msra.mxu0 0.0
        %1034 = vmatprep.subr.mxu0 0.0
        %1035 = vmatpush1.msra.mxu0 0.0
        %1036 = vmatprep.subr.mxu0 0.0
        %1037 = vmatpush1.msra.mxu0 0.0
        %1038 = vmatprep.subr.mxu0 0.0
        %1039 = vmatpush1.msra.mxu0 0.0
        %1040 = vmatprep.subr.mxu0 0.0
        %1041 = vmatpush1.msra.mxu0 0.0
        %1042 = vmatprep.subr.mxu0 0.0
        %1043 = vmatpush1.msra.mxu0 0.0
        %1044 = vmatprep.subr.mxu0 0.0
        %1045 = vmatpush1.msra.mxu0 0.0
        %1046 = vmatprep.subr.mxu0 0.0
        %1047 = vmatpush1.msra.mxu0 0.0
        %1048 = vmatprep.subr.mxu0 0.0
        %1049 = vmatpush1.msra.mxu0 0.0
        %1050 = vmatprep.subr.mxu0 0.0
        %1051 = vmatpush1.msra.mxu0 0.0
        %1052 = vmatprep.subr.mxu0 0.0
        %1053 = vmatpush1.msra.mxu0 0.0
        %1054 = vmatprep.subr.mxu0 0.0
        %1055 = vmatpush1.msra.mxu0 0.0
        %1056 = vmatprep.subr.mxu0 0.0
        %1057 = vmatpush1.msra.mxu0 0.0
        %1058 = vmatprep.subr.mxu0 0.0
        %1059 = vmatpush1.msra.mxu0 0.0
        %1060 = vmatprep.subr.mxu0 0.0
        %1061 = vmatpush1.msra.mxu0 0.0
        %1062 = vmatprep.subr.mxu0 0.0
        %1063 = vmatpush1.msra.mxu0 0.0
        %1064 = vmatprep.subr.mxu0 0.0
        %1065 = vmatpush1.msra.mxu0 0.0
        %1066 = vmatprep.subr.mxu0 0.0
        %1067 = vmatpush1.msra.mxu0 0.0
        %1068 = vmatprep.mubr.f32.mxu0 0.0
        %1069 = vmatmul.mubr.f32.gmra.mrb[0].mxu0 %v969
        %v1070 = vpop.f32.mrb[0].mxu0
        %v1071 = vadd.f32 %v966, %v1070
        %v1072 = vpop.f32.mrb[0].mxu0
        %1073 = vmatprep.mubr.f32.mxu0 0.0
        %1074 = vmatmul.mubr.f32.gmra.mrb[0].mxu0 %v972
        %v1075 = vpop.f32.mrb[0].mxu0
        %v1076 = vadd.f32 %v966, %v1075
        %v1077 = vpop.f32.mrb[0].mxu0
        %1078 = vmatprep.mubr.f32.mxu0 0.0
        %1079 = vmatmul.mubr.f32.gmra.mrb[0].mxu0 %v975
        %v1080 = vpop.f32.mrb[0].mxu0
        %v1081 = vadd.f32 %v966, %v1080
        %v1082 = vpop.f32.mrb[0].mxu0
        %1083 = vmatprep.mubr.f32.mxu0 0.0
        %1084 = vmatmul.mubr.f32.gmra.mrb[0].mxu0 %v978
        %v1085 = vpop.f32.mrb[0].mxu0
        %v1086 = vadd.f32 %v966, %v1085
        %v1087 = vpop.f32.mrb[0].mxu0
        %1088 = vmatprep.mubr.f32.mxu0 0.0
        %1089 = vmatmul.mubr.f32.gmra.mrb[0].mxu0 %v981
        %v1090 = vpop.f32.mrb[0].mxu0
        %v1091 = vadd.f32 %v966, %v1090
        %v1092 = vpop.f32.mrb[0].mxu0
        %1093 = vmatprep.mubr.f32.mxu0 0.0
        %1094 = vmatmul.mubr.f32.gmra.mrb[0].mxu0 %v984
        %v1095 = vpop.f32.mrb[0].mxu0
        %v1096 = vadd.f32 %v966, %v1095
        %v1097 = vpop.f32.mrb[0].mxu0
        %1098 = vmatprep.mubr.f32.mxu0 0.0
        %1099 = vmatmul.mubr.f32.gmra.mrb[0].mxu0 %v987
        %v1100 = vpop.f32.mrb[0].mxu0
        %v1101 = vadd.f32 %v966, %v1100
        %v1102 = vpop.f32.mrb[0].mxu0
        %1103 = vmatprep.mubr.f32.mxu0 0.0
        %1104 = vmatmul.mubr.f32.gmra.mrb[0].mxu0 %v990
        %v1105 = vpop.f32.mrb[0].mxu0
        %v1106 = vadd.f32 %v966, %v1105
        %v1107 = vpop.f32.mrb[0].mxu0
        %1108 = vmatprep.mubr.f32.mxu0 0.0
        %1109 = vmatmul.mubr.f32.gmra.mrb[0].mxu0 %v993
        %v1110 = vpop.f32.mrb[0].mxu0
        %v1111 = vadd.f32 %v966, %v1110
        %v1112 = vpop.f32.mrb[0].mxu0
        %1113 = vmatprep.mubr.f32.mxu0 0.0
        %1114 = vmatmul.mubr.f32.gmra.mrb[0].mxu0 %v996
        %v1115 = vpop.f32.mrb[0].mxu0
        %v1116 = vadd.f32 %v966, %v1115
        %v1117 = vpop.f32.mrb[0].mxu0
        %1118 = vmatprep.mubr.f32.mxu0 0.0
        %1119 = vmatmul.mubr.f32.gmra.mrb[0].mxu0 %v999
        %v1120 = vpop.f32.mrb[0].mxu0
        %v1121 = vadd.f32 %v966, %v1120
        %v1122 = vpop.f32.mrb[0].mxu0
        %1123 = vmatprep.mubr.f32.mxu0 0.0
        %1124 = vmatmul.mubr.f32.gmra.mrb[0].mxu0 %v1002
        %v1125 = vpop.f32.mrb[0].mxu0
        %v1126 = vadd.f32 %v966, %v1125
        %v1127 = vpop.f32.mrb[0].mxu0
        %1128 = vdwg.mxu0
        %1129 = vst.msk [vmem:[%s280] sm:$0xff] %vm323, %v1071
        %1130 = vst.msk [vmem:[%s280 + $0x8] sm:$0xff] %vm323, %v1076
        %1131 = vst.msk [vmem:[%s280 + $0x10] sm:$0xff] %vm323, %v1081
        %1132 = vst.msk [vmem:[%s280 + $0x18] sm:$0xff] %vm323, %v1086
        %1133 = vst.msk [vmem:[%s280 + $0x20] sm:$0xff] %vm323, %v1091
        %1134 = vst.msk [vmem:[%s280 + $0x28] sm:$0xff] %vm323, %v1096
        %1135 = vst.msk [vmem:[%s280 + $0x30] sm:$0xff] %vm323, %v1101
        %1136 = vst.msk [vmem:[%s280 + $0x38] sm:$0xff] %vm323, %v1106
        %1137 = vst.msk [vmem:[%s280 + $0x40] sm:$0xff] %vm323, %v1111
        %1138 = vst.msk [vmem:[%s280 + $0x48] sm:$0xff] %vm323, %v1116
        %1139 = vst.msk [vmem:[%s280 + $0x50] sm:$0xff] %vm323, %v1121
        %1140 = vst.msk [vmem:[%s280 + $0x58] sm:$0xff] %vm323, %v1126
        %s1141 = sand.u32 %s178, 1
        %s1142 = sand.u32 %s178, 1
        %s1143 = smul.addr %s1142, 96
        %s1144 = scalar_lea.vmem [#allocation2], %s1143
        // Predicated region
        $region49: #{tpu_custom_call.1} parent=47 // pred_check
          %p1145 = pneg %p188
        $region50: #{tpu_custom_call.1} parent=47 // pred_check_branch
          %1147 = sbr.rel (%p1145) target = $region52
        $region51: #{tpu_custom_call.1} parent=47 // pred_region
          %s1148 = smul.u32 12, %s18
          %s1149 = ssub.s32 32, %s1148
          %p1150 = scmp.lt.s32.totalorder %s1149, 12
          %s1151 = scalar_select %p1150, %s1149, 12
          %s1152 = smul.u32 128, %s1151
          %p1153 = scmp.ne.s32.totalorder 0, %s1152
          %s1154 = smul.addr %s1148, 8
          %s1155 = scalar_lea.vmem %s7, %s1154
          // Predicated region
          $region53: #{tpu_custom_call.1} parent=51 // pred_check
            %p1156 = pneg %p1153
          $region54: #{tpu_custom_call.1} parent=51 // pred_check_branch
            %1158 = sbr.rel (%p1156) target = $region56
          $region55: #{tpu_custom_call.1} parent=51 // pred_region
            // Predicated region
            $region57: #{tpu_custom_call.1} parent=55 // pred_check
              _
            $region58: #{tpu_custom_call.1} parent=55 // pred_check_branch
              %1160 = sbr.rel (0) target = $region60
            $region59: #{tpu_custom_call.1} parent=55 // pred_region
              // Predicated region
              $region79: #{tpu_custom_call.1} parent=59 // pred_check
                _
              $region80: #{tpu_custom_call.1} parent=59 // pred_check_branch
                %1232 = sbr.rel (0) target = $region82
              $region81: #{tpu_custom_call.1} parent=59 // pred_region
                %s1233 = sdiv.u32.pop %s1151, 12
                %s1234 = srem.u32.pop %s1151, 12
                // While loop
                $region83: #{tpu_custom_call.1} parent=81 // loop_pre_header
                  _
                $region84: #{tpu_custom_call.1} parent=81 // loop_header
                  %s1236 = sphi 0, %s1238
                  %p1237 = scmp.ge.s32.totalorder %s1236, %s1233
                  %s1241 = sphi 0, %s1270
                  %s1242 = sphi %s1144, %s1273
                  %s1243 = sphi %s1155, %s1274
                $region85: #{tpu_custom_call.1} parent=81 // loop_header_branch
                  %1240 = sbr.rel (%p1237) target = $region89
                $region86: #{tpu_custom_call.1} parent=81 // loop_body
                  %v1244 = vld [vmem:[%s1242] sm:$0xff]
                  %1245 = vst [vmem:[%s1243] sm:$0xff] %v1244
                  %v1246 = vld [vmem:[%s1242 + $0x8] sm:$0xff]
                  %1247 = vst [vmem:[%s1243 + $0x8] sm:$0xff] %v1246
                  %v1248 = vld [vmem:[%s1242 + $0x10] sm:$0xff]
                  %1249 = vst [vmem:[%s1243 + $0x10] sm:$0xff] %v1248
                  %v1250 = vld [vmem:[%s1242 + $0x18] sm:$0xff]
                  %1251 = vst [vmem:[%s1243 + $0x18] sm:$0xff] %v1250
                  %v1252 = vld [vmem:[%s1242 + $0x20] sm:$0xff]
                  %1253 = vst [vmem:[%s1243 + $0x20] sm:$0xff] %v1252
                  %v1254 = vld [vmem:[%s1242 + $0x28] sm:$0xff]
                  %1255 = vst [vmem:[%s1243 + $0x28] sm:$0xff] %v1254
                  %v1256 = vld [vmem:[%s1242 + $0x30] sm:$0xff]
                  %1257 = vst [vmem:[%s1243 + $0x30] sm:$0xff] %v1256
                  %v1258 = vld [vmem:[%s1242 + $0x38] sm:$0xff]
                  %1259 = vst [vmem:[%s1243 + $0x38] sm:$0xff] %v1258
                  %v1260 = vld [vmem:[%s1242 + $0x40] sm:$0xff]
                  %1261 = vst [vmem:[%s1243 + $0x40] sm:$0xff] %v1260
                  %v1262 = vld [vmem:[%s1242 + $0x48] sm:$0xff]
                  %1263 = vst [vmem:[%s1243 + $0x48] sm:$0xff] %v1262
                  %v1264 = vld [vmem:[%s1242 + $0x50] sm:$0xff]
                  %1265 = vst [vmem:[%s1243 + $0x50] sm:$0xff] %v1264
                  %v1266 = vld [vmem:[%s1242 + $0x58] sm:$0xff]
                  %1267 = vst [vmem:[%s1243 + $0x58] sm:$0xff] %v1266
                  %s1268 = sadd.s32 1, %s1241
                  %p1269 = scmp.ge.s32.totalorder %s1268, %s1233
                  %s1270 = scalar_select %p1269, 0, %s1268
                  %s1271 = smul.u32 %s1270, 96
                  %s1272 = smul.u32 %s1270, 96
                  %s1273 = scalar_lea.vmem %s1144, %s1271 [#allocation2]
                  %s1274 = scalar_lea.vmem %s1155, %s1272
                $region87: #{tpu_custom_call.1} parent=81 // loop_footer
                  %s1238 = sadd.s32 %s1236, 1
                $region88: #{tpu_custom_call.1} parent=81 // loop_footer_branch
                  %1235 = sbr.rel target = $region84
                $region89: #{tpu_custom_call.1} parent=81 // loop_exit
                  _
                %s1275 = sdiv.u32.pop %s1151, 12
                %s1276 = srem.u32.pop %s1151, 12
                %s1277 = smul.u32 %s1275, 12
                %s1278 = smul.u32 8, %s1277
                %s1279 = scalar_lea.vmem %s1144, %s1278 [#allocation2]
                %s1280 = smul.u32 8, %s1277
                %s1281 = scalar_lea.vmem %s1155, %s1280
                // While loop
                $region90: #{tpu_custom_call.1} parent=81 // loop_pre_header
                  _
                $region91: #{tpu_custom_call.1} parent=81 // loop_header
                  %s1283 = sphi 0, %s1285
                  %p1284 = scmp.ge.s32.totalorder %s1283, %s1276
                  %s1288 = sphi 0, %s1295
                  %s1289 = sphi %s1279, %s1298
                  %s1290 = sphi %s1281, %s1299
                $region92: #{tpu_custom_call.1} parent=81 // loop_header_branch
                  %1287 = sbr.rel (%p1284) target = $region96
                $region93: #{tpu_custom_call.1} parent=81 // loop_body
                  %v1291 = vld [vmem:[%s1289] sm:$0xff]
                  %1292 = vst [vmem:[%s1290] sm:$0xff] %v1291
                  %s1293 = sadd.s32 1, %s1288
                  %p1294 = scmp.ge.s32.totalorder %s1293, %s1276
                  %s1295 = scalar_select %p1294, 0, %s1293
                  %s1296 = smul.u32 %s1295, 8
                  %s1297 = smul.u32 %s1295, 8
                  %s1298 = scalar_lea.vmem %s1279, %s1296 [#allocation2]
                  %s1299 = scalar_lea.vmem %s1281, %s1297
                $region94: #{tpu_custom_call.1} parent=81 // loop_footer
                  %s1285 = sadd.s32 %s1283, 1
                $region95: #{tpu_custom_call.1} parent=81 // loop_footer_branch
                  %1282 = sbr.rel target = $region91
                $region96: #{tpu_custom_call.1} parent=81 // loop_exit
                  _
              $region82: #{tpu_custom_call.1} parent=59 // pred_fallthru
                _
              // Predicated region
              $region97: #{tpu_custom_call.1} parent=59 // pred_check
                _
              $region98: #{tpu_custom_call.1} parent=59 // pred_check_branch
                %1301 = sbr.rel target = $region100
              $region99: #{tpu_custom_call.1} parent=59 // pred_region
                _
              $region100: #{tpu_custom_call.1} parent=59 // pred_fallthru
                _
            $region60: #{tpu_custom_call.1} parent=55 // pred_fallthru
              _
            // Predicated region
            $region61: #{tpu_custom_call.1} parent=55 // pred_check
              _
            $region62: #{tpu_custom_call.1} parent=55 // pred_check_branch
              %1162 = sbr.rel target = $region64
            $region63: #{tpu_custom_call.1} parent=55 // pred_region
              %s1164 = sdiv.u32.pop %s1151, 12
              %s1165 = srem.u32.pop %s1151, 12
              // While loop
              $region65: #{tpu_custom_call.1} parent=63 // loop_pre_header
                _
              $region66: #{tpu_custom_call.1} parent=63 // loop_header
                %s1167 = sphi 0, %s1169
                %p1168 = scmp.ge.s32.totalorder %s1167, %s1164
                %s1172 = sphi 0, %s1201
                %s1173 = sphi %s1144, %s1204
                %s1174 = sphi %s1155, %s1205
              $region67: #{tpu_custom_call.1} parent=63 // loop_header_branch
                %1171 = sbr.rel (%p1168) target = $region71
              $region68: #{tpu_custom_call.1} parent=63 // loop_body
                %v1175 = vld [vmem:[%s1173] sm:$0xff]
                %1176 = vst [vmem:[%s1174] sm:$0xff] %v1175
                %v1177 = vld [vmem:[%s1173 + $0x8] sm:$0xff]
                %1178 = vst [vmem:[%s1174 + $0x8] sm:$0xff] %v1177
                %v1179 = vld [vmem:[%s1173 + $0x10] sm:$0xff]
                %1180 = vst [vmem:[%s1174 + $0x10] sm:$0xff] %v1179
                %v1181 = vld [vmem:[%s1173 + $0x18] sm:$0xff]
                %1182 = vst [vmem:[%s1174 + $0x18] sm:$0xff] %v1181
                %v1183 = vld [vmem:[%s1173 + $0x20] sm:$0xff]
                %1184 = vst [vmem:[%s1174 + $0x20] sm:$0xff] %v1183
                %v1185 = vld [vmem:[%s1173 + $0x28] sm:$0xff]
                %1186 = vst [vmem:[%s1174 + $0x28] sm:$0xff] %v1185
                %v1187 = vld [vmem:[%s1173 + $0x30] sm:$0xff]
                %1188 = vst [vmem:[%s1174 + $0x30] sm:$0xff] %v1187
                %v1189 = vld [vmem:[%s1173 + $0x38] sm:$0xff]
                %1190 = vst [vmem:[%s1174 + $0x38] sm:$0xff] %v1189
                %v1191 = vld [vmem:[%s1173 + $0x40] sm:$0xff]
                %1192 = vst [vmem:[%s1174 + $0x40] sm:$0xff] %v1191
                %v1193 = vld [vmem:[%s1173 + $0x48] sm:$0xff]
                %1194 = vst [vmem:[%s1174 + $0x48] sm:$0xff] %v1193
                %v1195 = vld [vmem:[%s1173 + $0x50] sm:$0xff]
                %1196 = vst [vmem:[%s1174 + $0x50] sm:$0xff] %v1195
                %v1197 = vld [vmem:[%s1173 + $0x58] sm:$0xff]
                %1198 = vst [vmem:[%s1174 + $0x58] sm:$0xff] %v1197
                %s1199 = sadd.s32 1, %s1172
                %p1200 = scmp.ge.s32.totalorder %s1199, %s1164
                %s1201 = scalar_select %p1200, 0, %s1199
                %s1202 = smul.u32 %s1201, 96
                %s1203 = smul.u32 %s1201, 96
                %s1204 = scalar_lea.vmem %s1144, %s1202 [#allocation2]
                %s1205 = scalar_lea.vmem %s1155, %s1203
              $region69: #{tpu_custom_call.1} parent=63 // loop_footer
                %s1169 = sadd.s32 %s1167, 1
              $region70: #{tpu_custom_call.1} parent=63 // loop_footer_branch
                %1166 = sbr.rel target = $region66
              $region71: #{tpu_custom_call.1} parent=63 // loop_exit
                _
              %s1206 = sdiv.u32.pop %s1151, 12
              %s1207 = srem.u32.pop %s1151, 12
              %s1208 = smul.u32 %s1206, 12
              %s1209 = smul.u32 8, %s1208
              %s1210 = scalar_lea.vmem %s1144, %s1209 [#allocation2]
              %s1211 = smul.u32 8, %s1208
              %s1212 = scalar_lea.vmem %s1155, %s1211
              // While loop
              $region72: #{tpu_custom_call.1} parent=63 // loop_pre_header
                _
              $region73: #{tpu_custom_call.1} parent=63 // loop_header
                %s1214 = sphi 0, %s1216
                %p1215 = scmp.ge.s32.totalorder %s1214, %s1207
                %s1219 = sphi 0, %s1226
                %s1220 = sphi %s1210, %s1229
                %s1221 = sphi %s1212, %s1230
              $region74: #{tpu_custom_call.1} parent=63 // loop_header_branch
                %1218 = sbr.rel (%p1215) target = $region78
              $region75: #{tpu_custom_call.1} parent=63 // loop_body
                %v1222 = vld [vmem:[%s1220] sm:$0xff]
                %1223 = vst [vmem:[%s1221] sm:$0xff] %v1222
                %s1224 = sadd.s32 1, %s1219
                %p1225 = scmp.ge.s32.totalorder %s1224, %s1207
                %s1226 = scalar_select %p1225, 0, %s1224
                %s1227 = smul.u32 %s1226, 8
                %s1228 = smul.u32 %s1226, 8
                %s1229 = scalar_lea.vmem %s1210, %s1227 [#allocation2]
                %s1230 = scalar_lea.vmem %s1212, %s1228
              $region76: #{tpu_custom_call.1} parent=63 // loop_footer
                %s1216 = sadd.s32 %s1214, 1
              $region77: #{tpu_custom_call.1} parent=63 // loop_footer_branch
                %1213 = sbr.rel target = $region73
              $region78: #{tpu_custom_call.1} parent=63 // loop_exit
                _
            $region64: #{tpu_custom_call.1} parent=55 // pred_fallthru
              _
          $region56: #{tpu_custom_call.1} parent=51 // pred_fallthru
            _
          %1302 = vnop
        $region52: #{tpu_custom_call.1} parent=47 // pred_fallthru
          _
      $region48: #{tpu_custom_call.1} parent=5 // pred_fallthru
        _
      %p1303 = scmp.le.s32.totalorder 2, %s13
      // Predicated region
      $region101: #{tpu_custom_call.1} parent=5 // pred_check
        %p1304 = pneg %p1303
      $region102: #{tpu_custom_call.1} parent=5 // pred_check_branch
        %1306 = sbr.rel (%p1304) target = $region104
      $region103: #{tpu_custom_call.1} parent=5 // pred_region
        %s1307 = ssub.s32 %s13, 2
        // Predicated region
        $region105: #{tpu_custom_call.1} parent=103 // pred_check
          %p1308 = pneg %p194
        $region106: #{tpu_custom_call.1} parent=103 // pred_check_branch
          %1310 = sbr.rel (%p1308) target = $region108
        $region107: #{tpu_custom_call.1} parent=103 // pred_region
          %s1311 = sand.u32 %s179, 1
          %s1312 = sand.u32 %s179, 1
          %s1313 = smul.addr %s1312, 96
          %s1314 = scalar_lea.vmem [#allocation2], %s1313
        $region108: #{tpu_custom_call.1} parent=103 // pred_fallthru
          _
      $region104: #{tpu_custom_call.1} parent=5 // pred_fallthru
        _
    $region6: #{tpu_custom_call.1} parent=1 // loop_footer
      %s17 = sadd.s32 1, %s13
    $region7: #{tpu_custom_call.1} parent=1 // loop_footer_branch
      %12 = sbr.rel target = $region3
    $region8: #{tpu_custom_call.1} parent=1 // loop_exit
      _

// kernel: tpu_custom_call.1
$region0: #{tpu_custom_call.1}
  #allocation0 [shape = 'u32[]', space=smem, size = 0x4, offset = 0x4, fixed_abs, tag = 'smem constant byte address 0x4 - core index']
  #allocation1 [shape = 'u32[144,128]{1,0:T(1,128)}', space=vmem, size = 0x12000, scoped, tag = 'internal scratch']
  %s0 = inlined_call_operand.vmem [shape: f32[256,32], index: 0, kind: input, shape index: {}]
  %s1 = inlined_call_operand.vmem [shape: f32[32,32], index: 1, kind: input, shape index: {}]
  %s2 = inlined_call_operand.vmem [shape: f32[1,32], index: 2, kind: input, shape index: {}]
  %s3 = inlined_call_operand.vmem [shape: f32[32,32], index: 3, kind: input, shape index: {}]
  %s4 = inlined_call_operand.vmem [shape: f32[1,32], index: 4, kind: input, shape index: {}]
  %s5 = inlined_call_operand.vmem [shape: f32[32,32], index: 5, kind: input, shape index: {}]
  %s6 = inlined_call_operand.vmem [shape: f32[1,32], index: 6, kind: input, shape index: {}]
  %s7 = inlined_call_operand.vmem [shape: f32[256,32], index: 7, kind: output, shape index: {}]
  %s8 = sld [smem:[#allocation0]]
  $region109: #{tpu_custom_call.1} parent=0
    _
  %s10 = ssub.s32 1, %s8
  %s11 = scalar_select 0, %s10, %s8
  $region1: #{tpu_custom_call.1} parent=0
    #allocation2 [shape = 'u8[98304]{0}', space=vmem, size = 0x18000, scoped, tag = 'output window, operand 0']
    loop: start=0, step=1, limit=5
    $region2: #{tpu_custom_call.1} parent=1 // loop_pre_header
      _
    $region3: #{tpu_custom_call.1} parent=1 // loop_header
      %s13 = sphi 0, %s17
      %p14 = scmp.ge.s32.totalorder %s13, 5
      %s23 = sphi 0, %s25
      %s26 = sphi 0, %s23
      %s27 = sphi 0, %s26
      %s43 = sphi 0, %s27
      %s47 = sphi 0, %s47
      %s49 = sphi 0, %s47
      %s50 = sphi 0, %s49
      %s64 = sphi 0, %s50
      %s68 = sphi 0, %s68
      %s70 = sphi 0, %s68
      %s71 = sphi 0, %s70
      %s85 = sphi 0, %s71
      %s89 = sphi 0, %s89
      %s91 = sphi 0, %s89
      %s92 = sphi 0, %s91
      %s106 = sphi 0, %s92
      %s110 = sphi 0, %s110
      %s112 = sphi 0, %s110
      %s113 = sphi 0, %s112
      %s127 = sphi 0, %s113
      %s131 = sphi 0, %s131
      %s133 = sphi 0, %s131
      %s134 = sphi 0, %s133
      %s148 = sphi 0, %s134
      %s152 = sphi 0, %s152
      %s154 = sphi 0, %s152
      %s155 = sphi 0, %s154
      %s169 = sphi 0, %s155
      %s175 = sphi 0, %s177
      %s178 = sphi 0, %s175
      %s179 = sphi 0, %s178
      %s195 = sphi 0, %s179
    $region4: #{tpu_custom_call.1} parent=1 // loop_header_branch
      %16 = sbr.rel (%p14) target = $region8
    $region5: #{tpu_custom_call.1} parent=1 // loop_body
      %s18 = ssub.s32 %s13, 1
      %s19 = ssub.s32 %s13, 2
      %s20 = sadd.s32 %s13, 1
      %s21 = ssub.s32 %s13, %s20
      %p22 = scmp.eq.s32.totalorder %s21, 0
      %s24 = sadd.s32 %s23, 1
      %s25 = scalar_select %p22, %s23, %s24
      %p28 = pneg %p22
      %p29 = scmp.eq.s32.totalorder %s13, 2
      %p30 = por %p28, %p29
      %p31 = scmp.ne.s32.totalorder %s23, %s26
      %p32 = scmp.eq.s32.totalorder %s13, 0
      %p33 = por %p31, %p32
      %p34 = scmp.ne.s32.totalorder %s23, %s26
      %p35 = scmp.eq.s32.totalorder %s18, 2
      %p36 = por %p34, %p35
      %p37 = scmp.ne.s32.totalorder %s26, %s27
      %p38 = scmp.eq.s32.totalorder %s18, 0
      %p39 = por %p37, %p38
      %p40 = scmp.ne.s32.totalorder %s26, %s27
      %p41 = scmp.eq.s32.totalorder %s19, 2
      %p42 = por %p40, %p41
      %p44 = scmp.ne.s32.totalorder %s27, %s43
      %p45 = scmp.eq.s32.totalorder %s19, 0
      %p46 = por %p44, %p45
      %s48 = sadd.s32 %s47, 1
      %p51 = scmp.eq.s32.totalorder %s13, 2
      %p52 = scmp.ne.s32.totalorder %s47, %s49
      %p53 = scmp.eq.s32.totalorder %s13, 0
      %p54 = por %p52, %p53
      %p55 = scmp.ne.s32.totalorder %s47, %s49
      %p56 = scmp.eq.s32.totalorder %s18, 2
      %p57 = por %p55, %p56
      %p58 = scmp.ne.s32.totalorder %s49, %s50
      %p59 = scmp.eq.s32.totalorder %s18, 0
      %p60 = por %p58, %p59
      %p61 = scmp.ne.s32.totalorder %s49, %s50
      %p62 = scmp.eq.s32.totalorder %s19, 2
      %p63 = por %p61, %p62
      %p65 = scmp.ne.s32.totalorder %s50, %s64
      %p66 = scmp.eq.s32.totalorder %s19, 0
      %p67 = por %p65, %p66
      %s69 = sadd.s32 %s68, 1
      %p72 = scmp.eq.s32.totalorder %s13, 2
      %p73 = scmp.ne.s32.totalorder %s68, %s70
      %p74 = scmp.eq.s32.totalorder %s13, 0
      %p75 = por %p73, %p74
      %p76 = scmp.ne.s32.totalorder %s68, %s70
      %p77 = scmp.eq.s32.totalorder %s18, 2
      %p78 = por %p76, %p77
      %p79 = scmp.ne.s32.totalorder %s70, %s71
      %p80 = scmp.eq.s32.totalorder %s18, 0
      %p81 = por %p79, %p80
      %p82 = scmp.ne.s32.totalorder %s70, %s71
      %p83 = scmp.eq.s32.totalorder %s19, 2
      %p84 = por %p82, %p83
      %p86 = scmp.ne.s32.totalorder %s71, %s85
      %p87 = scmp.eq.s32.totalorder %s19, 0
      %p88 = por %p86, %p87
      %s90 = sadd.s32 %s89, 1
      %p93 = scmp.eq.s32.totalorder %s13, 2
      %p94 = scmp.ne.s32.totalorder %s89, %s91
      %p95 = scmp.eq.s32.totalorder %s13, 0
      %p96 = por %p94, %p95
      %p97 = scmp.ne.s32.totalorder %s89, %s91
      %p98 = scmp.eq.s32.totalorder %s18, 2
      %p99 = por %p97, %p98
      %p100 = scmp.ne.s32.totalorder %s91, %s92
      %p101 = scmp.eq.s32.totalorder %s18, 0
      %p102 = por %p100, %p101
      %p103 = scmp.ne.s32.totalorder %s91, %s92
      %p104 = scmp.eq.s32.totalorder %s19, 2
      %p105 = por %p103, %p104
      %p107 = scmp.ne.s32.totalorder %s92, %s106
      %p108 = scmp.eq.s32.totalorder %s19, 0
      %p109 = por %p107, %p108
      %s111 = sadd.s32 %s110, 1
      %p114 = scmp.eq.s32.totalorder %s13, 2
      %p115 = scmp.ne.s32.totalorder %s110, %s112
      %p116 = scmp.eq.s32.totalorder %s13, 0
      %p117 = por %p115, %p116
      %p118 = scmp.ne.s32.totalorder %s110, %s112
      %p119 = scmp.eq.s32.totalorder %s18, 2
      %p120 = por %p118, %p119
      %p121 = scmp.ne.s32.totalorder %s112, %s113
      %p122 = scmp.eq.s32.totalorder %s18, 0
      %p123 = por %p121, %p122
      %p124 = scmp.ne.s32.totalorder %s112, %s113
      %p125 = scmp.eq.s32.totalorder %s19, 2
      %p126 = por %p124, %p125
      %p128 = scmp.ne.s32.totalorder %s113, %s127
      %p129 = scmp.eq.s32.totalorder %s19, 0
      %p130 = por %p128, %p129
      %s132 = sadd.s32 %s131, 1
      %p135 = scmp.eq.s32.totalorder %s13, 2
      %p136 = scmp.ne.s32.totalorder %s131, %s133
      %p137 = scmp.eq.s32.totalorder %s13, 0
      %p138 = por %p136, %p137
      %p139 = scmp.ne.s32.totalorder %s131, %s133
      %p140 = scmp.eq.s32.totalorder %s18, 2
      %p141 = por %p139, %p140
      %p142 = scmp.ne.s32.totalorder %s133, %s134
      %p143 = scmp.eq.s32.totalorder %s18, 0
      %p144 = por %p142, %p143
      %p145 = scmp.ne.s32.totalorder %s133, %s134
      %p146 = scmp.eq.s32.totalorder %s19, 2
      %p147 = por %p145, %p146
      %p149 = scmp.ne.s32.totalorder %s134, %s148
      %p150 = scmp.eq.s32.totalorder %s19, 0
      %p151 = por %p149, %p150
      %s153 = sadd.s32 %s152, 1
      %p156 = scmp.eq.s32.totalorder %s13, 2
      %p157 = scmp.ne.s32.totalorder %s152, %s154
      %p158 = scmp.eq.s32.totalorder %s13, 0
      %p159 = por %p157, %p158
      %p160 = scmp.ne.s32.totalorder %s152, %s154
      %p161 = scmp.eq.s32.totalorder %s18, 2
      %p162 = por %p160, %p161
      %p163 = scmp.ne.s32.totalorder %s154, %s155
      %p164 = scmp.eq.s32.totalorder %s18, 0
      %p165 = por %p163, %p164
      %p166 = scmp.ne.s32.totalorder %s154, %s155
      %p167 = scmp.eq.s32.totalorder %s19, 2
      %p168 = por %p166, %p167
      %p170 = scmp.ne.s32.totalorder %s155, %s169
      %p171 = scmp.eq.s32.totalorder %s19, 0
      %p172 = por %p170, %p171
      %s173 = ssub.s32 %s13, %s20
      %p174 = scmp.eq.s32.totalorder %s173, 0
      %s176 = sadd.s32 %s175, 1
      %s177 = scalar_select %p174, %s175, %s176
      %p180 = pneg %p174
      %p181 = scmp.eq.s32.totalorder %s13, 2
      %p182 = por %p180, %p181
      %p183 = scmp.ne.s32.totalorder %s175, %s178
      %p184 = scmp.eq.s32.totalorder %s13, 0
      %p185 = por %p183, %p184
      %p186 = scmp.ne.s32.totalorder %s175, %s178
      %p187 = scmp.eq.s32.totalorder %s18, 2
      %p188 = por %p186, %p187
      %p189 = scmp.ne.s32.totalorder %s178, %s179
      %p190 = scmp.eq.s32.totalorder %s18, 0
      %p191 = por %p189, %p190
      %p192 = scmp.ne.s32.totalorder %s178, %s179
      %p193 = scmp.eq.s32.totalorder %s19, 2
      %p194 = por %p192, %p193
      %p196 = scmp.ne.s32.totalorder %s179, %s195
      %p197 = scmp.eq.s32.totalorder %s19, 0
      %p198 = por %p196, %p197
      %p199 = scmp.le.s32.totalorder 1, %s13
      %p200 = scmp.lt.s32.totalorder %s13, 4
      %p201 = pnand %p199, %p200
      %p202 = pneg %p201
      // Predicated region
      $region9: #{tpu_custom_call.1} parent=5 // pred_check
        _
      $region10: #{tpu_custom_call.1} parent=5 // pred_check_branch
        %204 = sbr.rel (%p201) target = $region12
      $region11: #{tpu_custom_call.1} parent=5 // pred_region
        %s205 = ssub.s32 %s13, 1
        // Predicated region
        $region13: #{tpu_custom_call.1} parent=11 // pred_check
          %p206 = pneg %p60
        $region14: #{tpu_custom_call.1} parent=11 // pred_check_branch
          %208 = sbr.rel (%p206) target = $region16
        $region15: #{tpu_custom_call.1} parent=11 // pred_region
          _
        $region16: #{tpu_custom_call.1} parent=11 // pred_fallthru
          _
        // Predicated region
        $region17: #{tpu_custom_call.1} parent=11 // pred_check
          %p209 = pneg %p81
        $region18: #{tpu_custom_call.1} parent=11 // pred_check_branch
          %211 = sbr.rel (%p209) target = $region20
        $region19: #{tpu_custom_call.1} parent=11 // pred_region
          _
        $region20: #{tpu_custom_call.1} parent=11 // pred_fallthru
          _
        // Predicated region
        $region21: #{tpu_custom_call.1} parent=11 // pred_check
          %p212 = pneg %p102
        $region22: #{tpu_custom_call.1} parent=11 // pred_check_branch
          %214 = sbr.rel (%p212) target = $region24
        $region23: #{tpu_custom_call.1} parent=11 // pred_region
          _
        $region24: #{tpu_custom_call.1} parent=11 // pred_fallthru
          _
        // Predicated region
        $region25: #{tpu_custom_call.1} parent=11 // pred_check
          %p215 = pneg %p123
        $region26: #{tpu_custom_call.1} parent=11 // pred_check_branch
          %217 = sbr.rel (%p215) target = $region28
        $region27: #{tpu_custom_call.1} parent=11 // pred_region
          _
        $region28: #{tpu_custom_call.1} parent=11 // pred_fallthru
          _
        // Predicated region
        $region29: #{tpu_custom_call.1} parent=11 // pred_check
          %p218 = pneg %p144
        $region30: #{tpu_custom_call.1} parent=11 // pred_check_branch
          %220 = sbr.rel (%p218) target = $region32
        $region31: #{tpu_custom_call.1} parent=11 // pred_region
          _
        $region32: #{tpu_custom_call.1} parent=11 // pred_fallthru
          _
        // Predicated region
        $region33: #{tpu_custom_call.1} parent=11 // pred_check
          %p221 = pneg %p165
        $region34: #{tpu_custom_call.1} parent=11 // pred_check_branch
          %223 = sbr.rel (%p221) target = $region36
        $region35: #{tpu_custom_call.1} parent=11 // pred_region
          _
        $region36: #{tpu_custom_call.1} parent=11 // pred_fallthru
          _
      $region12: #{tpu_custom_call.1} parent=5 // pred_fallthru
        _
      %p224 = scmp.lt.s32.totalorder %s13, 3
      // Predicated region
      $region37: #{tpu_custom_call.1} parent=5 // pred_check
        %p225 = pneg %p224
      $region38: #{tpu_custom_call.1} parent=5 // pred_check_branch
        %227 = sbr.rel (%p225) target = $region40
      $region39: #{tpu_custom_call.1} parent=5 // pred_region
        // Predicated region
        $region41: #{tpu_custom_call.1} parent=39 // pred_check
          %p228 = pneg %p33
        $region42: #{tpu_custom_call.1} parent=39 // pred_check_branch
          %230 = sbr.rel (%p228) target = $region44
        $region43: #{tpu_custom_call.1} parent=39 // pred_region
          %s231 = smul.u32 12, %s13
          %s232 = ssub.s32 32, %s231
          %p233 = scmp.lt.s32.totalorder %s232, 12
          %s234 = scalar_select %p233, %s232, 12
          %s235 = smul.u32 128, %s234
          %p236 = scmp.lt.s32.totalorder %s231, 31
          %s237 = scalar_select %p236, %s231, 31
          %s238 = smul.addr %s237, 8
          %s239 = scalar_lea.vmem %s0, %s238
          %s240 = smul.u32 12, %s13
          %s241 = ssub.s32 32, %s240
          %p242 = scmp.lt.s32.totalorder %s241, 12
          %s243 = scalar_select %p242, %s241, 12
          %s244 = smul.u32 128, %s243
        $region44: #{tpu_custom_call.1} parent=39 // pred_fallthru
          _
      $region40: #{tpu_custom_call.1} parent=5 // pred_fallthru
        _
      %p245 = scmp.le.s32.totalorder 1, %s13
      %p246 = scmp.lt.s32.totalorder %s13, 4
      %p247 = pnand %p245, %p246
      %p248 = pneg %p247
      // Predicated region
      $region45: #{tpu_custom_call.1} parent=5 // pred_check
        _
      $region46: #{tpu_custom_call.1} parent=5 // pred_check_branch
        %250 = sbr.rel (%p247) target = $region48
      $region47: #{tpu_custom_call.1} parent=5 // pred_region
        %s251 = ssub.s32 %s13, 1
        %s252 = smul.u32 12, %s18
        %s253 = ssub.s32 32, %s252
        %p254 = scmp.lt.s32.totalorder %s253, 12
        %s255 = scalar_select %p254, %s253, 12
        %s256 = smul.u32 128, %s255
        %p257 = scmp.lt.s32.totalorder %s252, 31
        %s258 = scalar_select %p257, %s252, 31
        %s259 = smul.addr %s258, 8
        %s260 = scalar_lea.vmem %s0, %s259
        %p261 = pneg %p39
        %p262 = pneg %p36
        %p263 = pneg %p60
        %p264 = pneg %p57
        %p265 = pneg %p81
        %p266 = pneg %p78
        %p267 = pneg %p102
        %p268 = pneg %p99
        %p269 = pneg %p123
        %p270 = pneg %p120
        %p271 = pneg %p144
        %p272 = pneg %p141
        %p273 = pneg %p165
        %p274 = pneg %p162
        %p275 = pneg %p191
        %p276 = pneg %p188
        %s277 = sand.u32 %s178, 1
        %s278 = sand.u32 %s178, 1
        %s279 = smul.addr %s278, 96
        %s280 = scalar_lea.vmem [#allocation2], %s279
        %s281 = smul.u32 12, %s18
        %s282 = ssub.s32 32, %s281
        %p283 = scmp.lt.s32.totalorder %s282, 12
        %s284 = scalar_select %p283, %s282, 12
        %s285 = smul.u32 128, %s284
        %p286 = scmp.lt.s32.totalorder %s281, 31
        %s287 = scalar_select %p286, %s281, 31
        %s288 = smul.addr %s287, 8
        %s289 = scalar_lea.vmem %s0, %s288
        %s290 = smul.u32 12, %s18
        %s291 = ssub.s32 32, %s290
        %p292 = scmp.lt.s32.totalorder %s291, 12
        %s293 = scalar_select %p292, %s291, 12
        %s294 = smul.u32 128, %s293
        %s295 = smul.u32 12, %s18
        %s296 = ssub.s32 32, %s295
        %p297 = scmp.lt.s32.totalorder %s296, 12
        %s298 = scalar_select %p297, %s296, 12
        %s299 = smul.u32 128, %s298
        %v300 = vld [vmem:[%s289] sm:$0xff]
        %v301 = vld [vmem:[%s289 + $0x8] sm:$0xff]
        %v302 = vld [vmem:[%s289 + $0x10] sm:$0xff]
        %v303 = vld [vmem:[%s289 + $0x18] sm:$0xff]
        %v304 = vld [vmem:[%s289 + $0x20] sm:$0xff]
        %v305 = vld [vmem:[%s289 + $0x28] sm:$0xff]
        %v306 = vld [vmem:[%s289 + $0x30] sm:$0xff]
        %v307 = vld [vmem:[%s289 + $0x38] sm:$0xff]
        %v308 = vld [vmem:[%s289 + $0x40] sm:$0xff]
        %v309 = vld [vmem:[%s289 + $0x48] sm:$0xff]
        %v310 = vld [vmem:[%s289 + $0x50] sm:$0xff]
        %v311 = vld [vmem:[%s289 + $0x58] sm:$0xff]
        %v312 = vld [vmem:[%s1] sm:$0xff]
        %v313 = vld [vmem:[%s1 + $0x8] sm:$0xff]
        %v314 = vld [vmem:[%s1 + $0x10] sm:$0xff]
        %v315 = vld [vmem:[%s1 + $0x18] sm:$0xff]
        %v316 = vld [vmem:[%s2] sm:$0x1]
        %v318 = vlaneseq
        %v319 = vshrl.u32 %v318, 7
        %v320 = vsub.s32 0, %v319
        %v321 = vrot.slane %v316, %v320
        %vm323 = vcmask 261120
        %v325 = vsel %vm323, %v300, 0
        %v328 = vsel %vm323, %v301, 0
        %v331 = vsel %vm323, %v302, 0
        %v334 = vsel %vm323, %v303, 0
        %v337 = vsel %vm323, %v304, 0
        %v340 = vsel %vm323, %v305, 0
        %v343 = vsel %vm323, %v306, 0
        %v346 = vsel %vm323, %v307, 0
        %v349 = vsel %vm323, %v308, 0
        %v352 = vsel %vm323, %v309, 0
        %v355 = vsel %vm323, %v310, 0
        %v358 = vsel %vm323, %v311, 0
        %360 = vmatprep.subr.mxu0 0.0
        %361 = vmatpush1.msra.mxu0 %v312
        %362 = vmatprep.subr.mxu0 0.0
        %363 = vmatpush1.msra.mxu0 %v313
        %364 = vmatprep.subr.mxu0 0.0
        %365 = vmatpush1.msra.mxu0 %v314
        %366 = vmatprep.subr.mxu0 0.0
        %367 = vmatpush1.msra.mxu0 %v315
        %368 = vmatprep.subr.mxu0 0.0
        %369 = vmatpush1.msra.mxu0 0.0
        %370 = vmatprep.subr.mxu0 0.0
        %371 = vmatpush1.msra.mxu0 0.0
        %372 = vmatprep.subr.mxu0 0.0
        %373 = vmatpush1.msra.mxu0 0.0
        %374 = vmatprep.subr.mxu0 0.0
        %375 = vmatpush1.msra.mxu0 0.0
        %376 = vmatprep.subr.mxu0 0.0
        %377 = vmatpush1.msra.mxu0 0.0
        %378 = vmatprep.subr.mxu0 0.0
        %379 = vmatpush1.msra.mxu0 0.0
        %380 = vmatprep.subr.mxu0 0.0
        %381 = vmatpush1.msra.mxu0 0.0
        %382 = vmatprep.subr.mxu0 0.0
        %383 = vmatpush1.msra.mxu0 0.0
        %384 = vmatprep.subr.mxu0 0.0
        %385 = vmatpush1.msra.mxu0 0.0
        %386 = vmatprep.subr.mxu0 0.0
        %387 = vmatpush1.msra.mxu0 0.0
        %388 = vmatprep.subr.mxu0 0.0
        %389 = vmatpush1.msra.mxu0 0.0
        %390 = vmatprep.subr.mxu0 0.0
        %391 = vmatpush1.msra.mxu0 0.0
        %392 = vmatprep.subr.mxu0 0.0
        %393 = vmatpush1.msra.mxu0 0.0
        %394 = vmatprep.subr.mxu0 0.0
        %395 = vmatpush1.msra.mxu0 0.0
        %396 = vmatprep.subr.mxu0 0.0
        %397 = vmatpush1.msra.mxu0 0.0
        %398 = vmatprep.subr.mxu0 0.0
        %399 = vmatpush1.msra.mxu0 0.0
        %400 = vmatprep.subr.mxu0 0.0
        %401 = vmatpush1.msra.mxu0 0.0
        %402 = vmatprep.subr.mxu0 0.0
        %403 = vmatpush1.msra.mxu0 0.0
        %404 = vmatprep.subr.mxu0 0.0
        %405 = vmatpush1.msra.mxu0 0.0
        %406 = vmatprep.subr.mxu0 0.0
        %407 = vmatpush1.msra.mxu0 0.0
        %408 = vmatprep.subr.mxu0 0.0
        %409 = vmatpush1.msra.mxu0 0.0
        %410 = vmatprep.subr.mxu0 0.0
        %411 = vmatpush1.msra.mxu0 0.0
        %412 = vmatprep.subr.mxu0 0.0
        %413 = vmatpush1.msra.mxu0 0.0
        %414 = vmatprep.subr.mxu0 0.0
        %415 = vmatpush1.msra.mxu0 0.0
        %416 = vmatprep.subr.mxu0 0.0
        %417 = vmatpush1.msra.mxu0 0.0
        %418 = vmatprep.subr.mxu0 0.0
        %419 = vmatpush1.msra.mxu0 0.0
        %420 = vmatprep.subr.mxu0 0.0
        %421 = vmatpush1.msra.mxu0 0.0
        %422 = vmatprep.subr.mxu0 0.0
        %423 = vmatpush1.msra.mxu0 0.0
        %424 = vmatprep.mubr.f32.mxu0 0.0
        %425 = vmatmul.mubr.f32.gmra.mrb[0].mxu0 %v325
        %v426 = vpop.f32.mrb[0].mxu0
        %v427 = vadd.f32 %v321, %v426
        %v428 = vpop.f32.mrb[0].mxu0
        %429 = vmatprep.mubr.f32.mxu0 0.0
        %430 = vmatmul.mubr.f32.gmra.mrb[0].mxu0 %v328
        %v431 = vpop.f32.mrb[0].mxu0
        %v432 = vadd.f32 %v321, %v431
        %v433 = vpop.f32.mrb[0].mxu0
        %434 = vmatprep.mubr.f32.mxu0 0.0
        %435 = vmatmul.mubr.f32.gmra.mrb[0].mxu0 %v331
        %v436 = vpop.f32.mrb[0].mxu0
        %v437 = vadd.f32 %v321, %v436
        %v438 = vpop.f32.mrb[0].mxu0
        %439 = vmatprep.mubr.f32.mxu0 0.0
        %440 = vmatmul.mubr.f32.gmra.mrb[0].mxu0 %v334
        %v441 = vpop.f32.mrb[0].mxu0
        %v442 = vadd.f32 %v321, %v441
        %v443 = vpop.f32.mrb[0].mxu0
        %444 = vmatprep.mubr.f32.mxu0 0.0
        %445 = vmatmul.mubr.f32.gmra.mrb[0].mxu0 %v337
        %v446 = vpop.f32.mrb[0].mxu0
        %v447 = vadd.f32 %v321, %v446
        %v448 = vpop.f32.mrb[0].mxu0
        %449 = vmatprep.mubr.f32.mxu0 0.0
        %450 = vmatmul.mubr.f32.gmra.mrb[0].mxu0 %v340
        %v451 = vpop.f32.mrb[0].mxu0
        %v452 = vadd.f32 %v321, %v451
        %v453 = vpop.f32.mrb[0].mxu0
        %454 = vmatprep.mubr.f32.mxu0 0.0
        %455 = vmatmul.mubr.f32.gmra.mrb[0].mxu0 %v343
        %v456 = vpop.f32.mrb[0].mxu0
        %v457 = vadd.f32 %v321, %v456
        %v458 = vpop.f32.mrb[0].mxu0
        %459 = vmatprep.mubr.f32.mxu0 0.0
        %460 = vmatmul.mubr.f32.gmra.mrb[0].mxu0 %v346
        %v461 = vpop.f32.mrb[0].mxu0
        %v462 = vadd.f32 %v321, %v461
        %v463 = vpop.f32.mrb[0].mxu0
        %464 = vmatprep.mubr.f32.mxu0 0.0
        %465 = vmatmul.mubr.f32.gmra.mrb[0].mxu0 %v349
        %v466 = vpop.f32.mrb[0].mxu0
        %v467 = vadd.f32 %v321, %v466
        %v468 = vpop.f32.mrb[0].mxu0
        %469 = vmatprep.mubr.f32.mxu0 0.0
        %470 = vmatmul.mubr.f32.gmra.mrb[0].mxu0 %v352
        %v471 = vpop.f32.mrb[0].mxu0
        %v472 = vadd.f32 %v321, %v471
        %v473 = vpop.f32.mrb[0].mxu0
        %474 = vmatprep.mubr.f32.mxu0 0.0
        %475 = vmatmul.mubr.f32.gmra.mrb[0].mxu0 %v355
        %v476 = vpop.f32.mrb[0].mxu0
        %v477 = vadd.f32 %v321, %v476
        %v478 = vpop.f32.mrb[0].mxu0
        %479 = vmatprep.mubr.f32.mxu0 0.0
        %480 = vmatmul.mubr.f32.gmra.mrb[0].mxu0 %v358
        %v481 = vpop.f32.mrb[0].mxu0
        %v482 = vadd.f32 %v321, %v481
        %v483 = vpop.f32.mrb[0].mxu0
        %484 = vdwg.mxu0
        %v485 = vld [vmem:[%s3] sm:$0xff]
        %v486 = vld [vmem:[%s3 + $0x8] sm:$0xff]
        %v487 = vld [vmem:[%s3 + $0x10] sm:$0xff]
        %v488 = vld [vmem:[%s3 + $0x18] sm:$0xff]
        %v489 = vld [vmem:[%s4] sm:$0x1]
        %v491 = vlaneseq
        %v492 = vshrl.u32 %v491, 7
        %v493 = vsub.s32 0, %v492
        %v494 = vrot.slane %v489, %v493
        %496 = vmatprep.subr.mxu0 0.0
        %497 = vmatpush1.msra.mxu0 %v485
        %498 = vmatprep.subr.mxu0 0.0
        %499 = vmatpush1.msra.mxu0 %v486
        %500 = vmatprep.subr.mxu0 0.0
        %501 = vmatpush1.msra.mxu0 %v487
        %502 = vmatprep.subr.mxu0 0.0
        %503 = vmatpush1.msra.mxu0 %v488
        %504 = vmatprep.subr.mxu0 0.0
        %505 = vmatpush1.msra.mxu0 0.0
        %506 = vmatprep.subr.mxu0 0.0
        %507 = vmatpush1.msra.mxu0 0.0
        %508 = vmatprep.subr.mxu0 0.0
        %509 = vmatpush1.msra.mxu0 0.0
        %510 = vmatprep.subr.mxu0 0.0
        %511 = vmatpush1.msra.mxu0 0.0
        %512 = vmatprep.subr.mxu0 0.0
        %513 = vmatpush1.msra.mxu0 0.0
        %514 = vmatprep.subr.mxu0 0.0
        %515 = vmatpush1.msra.mxu0 0.0
        %516 = vmatprep.subr.mxu0 0.0
        %517 = vmatpush1.msra.mxu0 0.0
        %518 = vmatprep.subr.mxu0 0.0
        %519 = vmatpush1.msra.mxu0 0.0
        %520 = vmatprep.subr.mxu0 0.0
        %521 = vmatpush1.msra.mxu0 0.0
        %522 = vmatprep.subr.mxu0 0.0
        %523 = vmatpush1.msra.mxu0 0.0
        %524 = vmatprep.subr.mxu0 0.0
        %525 = vmatpush1.msra.mxu0 0.0
        %526 = vmatprep.subr.mxu0 0.0
        %527 = vmatpush1.msra.mxu0 0.0
        %528 = vmatprep.subr.mxu0 0.0
        %529 = vmatpush1.msra.mxu0 0.0
        %530 = vmatprep.subr.mxu0 0.0
        %531 = vmatpush1.msra.mxu0 0.0
        %532 = vmatprep.subr.mxu0 0.0
        %533 = vmatpush1.msra.mxu0 0.0
        %534 = vmatprep.subr.mxu0 0.0
        %535 = vmatpush1.msra.mxu0 0.0
        %536 = vmatprep.subr.mxu0 0.0
        %537 = vmatpush1.msra.mxu0 0.0
        %538 = vmatprep.subr.mxu0 0.0
        %539 = vmatpush1.msra.mxu0 0.0
        %540 = vmatprep.subr.mxu0 0.0
        %541 = vmatpush1.msra.mxu0 0.0
        %542 = vmatprep.subr.mxu0 0.0
        %543 = vmatpush1.msra.mxu0 0.0
        %544 = vmatprep.subr.mxu0 0.0
        %545 = vmatpush1.msra.mxu0 0.0
        %546 = vmatprep.subr.mxu0 0.0
        %547 = vmatpush1.msra.mxu0 0.0
        %548 = vmatprep.subr.mxu0 0.0
        %549 = vmatpush1.msra.mxu0 0.0
        %550 = vmatprep.subr.mxu0 0.0
        %551 = vmatpush1.msra.mxu0 0.0
        %552 = vmatprep.subr.mxu0 0.0
        %553 = vmatpush1.msra.mxu0 0.0
        %554 = vmatprep.subr.mxu0 0.0
        %555 = vmatpush1.msra.mxu0 0.0
        %556 = vmatprep.subr.mxu0 0.0
        %557 = vmatpush1.msra.mxu0 0.0
        %558 = vmatprep.subr.mxu0 0.0
        %559 = vmatpush1.msra.mxu0 0.0
        %560 = vmatprep.mubr.f32.mxu0 0.0
        %561 = vmatmul.mubr.f32.gmra.mrb[0].mxu0 %v325
        %v562 = vpop.f32.mrb[0].mxu0
        %v563 = vadd.f32 %v494, %v562
        %v564 = vpop.f32.mrb[0].mxu0
        %565 = vmatprep.mubr.f32.mxu0 0.0
        %566 = vmatmul.mubr.f32.gmra.mrb[0].mxu0 %v328
        %v567 = vpop.f32.mrb[0].mxu0
        %v568 = vadd.f32 %v494, %v567
        %v569 = vpop.f32.mrb[0].mxu0
        %570 = vmatprep.mubr.f32.mxu0 0.0
        %571 = vmatmul.mubr.f32.gmra.mrb[0].mxu0 %v331
        %v572 = vpop.f32.mrb[0].mxu0
        %v573 = vadd.f32 %v494, %v572
        %v574 = vpop.f32.mrb[0].mxu0
        %575 = vmatprep.mubr.f32.mxu0 0.0
        %576 = vmatmul.mubr.f32.gmra.mrb[0].mxu0 %v334
        %v577 = vpop.f32.mrb[0].mxu0
        %v578 = vadd.f32 %v494, %v577
        %v579 = vpop.f32.mrb[0].mxu0
        %580 = vmatprep.mubr.f32.mxu0 0.0
        %581 = vmatmul.mubr.f32.gmra.mrb[0].mxu0 %v337
        %v582 = vpop.f32.mrb[0].mxu0
        %v583 = vadd.f32 %v494, %v582
        %v584 = vpop.f32.mrb[0].mxu0
        %585 = vmatprep.mubr.f32.mxu0 0.0
        %586 = vmatmul.mubr.f32.gmra.mrb[0].mxu0 %v340
        %v587 = vpop.f32.mrb[0].mxu0
        %v588 = vadd.f32 %v494, %v587
        %v589 = vpop.f32.mrb[0].mxu0
        %590 = vmatprep.mubr.f32.mxu0 0.0
        %591 = vmatmul.mubr.f32.gmra.mrb[0].mxu0 %v343
        %v592 = vpop.f32.mrb[0].mxu0
        %v593 = vadd.f32 %v494, %v592
        %v594 = vpop.f32.mrb[0].mxu0
        %595 = vmatprep.mubr.f32.mxu0 0.0
        %596 = vmatmul.mubr.f32.gmra.mrb[0].mxu0 %v346
        %v597 = vpop.f32.mrb[0].mxu0
        %v598 = vadd.f32 %v494, %v597
        %v599 = vpop.f32.mrb[0].mxu0
        %600 = vmatprep.mubr.f32.mxu0 0.0
        %601 = vmatmul.mubr.f32.gmra.mrb[0].mxu0 %v349
        %v602 = vpop.f32.mrb[0].mxu0
        %v603 = vadd.f32 %v494, %v602
        %v604 = vpop.f32.mrb[0].mxu0
        %605 = vmatprep.mubr.f32.mxu0 0.0
        %606 = vmatmul.mubr.f32.gmra.mrb[0].mxu0 %v352
        %v607 = vpop.f32.mrb[0].mxu0
        %v608 = vadd.f32 %v494, %v607
        %v609 = vpop.f32.mrb[0].mxu0
        %610 = vmatprep.mubr.f32.mxu0 0.0
        %611 = vmatmul.mubr.f32.gmra.mrb[0].mxu0 %v355
        %v612 = vpop.f32.mrb[0].mxu0
        %v613 = vadd.f32 %v494, %v612
        %v614 = vpop.f32.mrb[0].mxu0
        %615 = vmatprep.mubr.f32.mxu0 0.0
        %616 = vmatmul.mubr.f32.gmra.mrb[0].mxu0 %v358
        %v617 = vpop.f32.mrb[0].mxu0
        %v618 = vadd.f32 %v494, %v617
        %v619 = vpop.f32.mrb[0].mxu0
        %620 = vdwg.mxu0
        %v621 = vmul.f32 %v427, 0.5
        %v622 = vmul.f32 %v432, 0.5
        %v623 = vmul.f32 %v437, 0.5
        %v624 = vmul.f32 %v442, 0.5
        %v625 = vmul.f32 %v447, 0.5
        %v626 = vmul.f32 %v452, 0.5
        %v627 = vmul.f32 %v457, 0.5
        %v628 = vmul.f32 %v462, 0.5
        %v629 = vmul.f32 %v467, 0.5
        %v630 = vmul.f32 %v472, 0.5
        %v631 = vmul.f32 %v477, 0.5
        %v632 = vmul.f32 %v482, 0.5
        %v633 = vmul.f32 %v427, 0.70710677
        %v634 = vmul.f32 %v432, 0.70710677
        %v635 = vmul.f32 %v437, 0.70710677
        %v636 = vmul.f32 %v442, 0.70710677
        %v637 = vmul.f32 %v447, 0.70710677
        %v638 = vmul.f32 %v452, 0.70710677
        %v639 = vmul.f32 %v457, 0.70710677
        %v640 = vmul.f32 %v462, 0.70710677
        %v641 = vmul.f32 %v467, 0.70710677
        %v642 = vmul.f32 %v472, 0.70710677
        %v643 = vmul.f32 %v477, 0.70710677
        %v644 = vmul.f32 %v482, 0.70710677
        %v645 = vand.u32 2147483647, %v633
        %v646 = vand.u32 2147483647, %v634
        %v647 = vand.u32 2147483647, %v635
        %v648 = vand.u32 2147483647, %v636
        %v649 = vand.u32 2147483647, %v637
        %v650 = vand.u32 2147483647, %v638
        %v651 = vand.u32 2147483647, %v639
        %v652 = vand.u32 2147483647, %v640
        %v653 = vand.u32 2147483647, %v641
        %v654 = vand.u32 2147483647, %v642
        %v655 = vand.u32 2147483647, %v643
        %v656 = vand.u32 2147483647, %v644
        %v657 = vmul.f32 %v645, 0.3275911
        %v658 = vmul.f32 %v646, 0.3275911
        %v659 = vmul.f32 %v647, 0.3275911
        %v660 = vmul.f32 %v648, 0.3275911
        %v661 = vmul.f32 %v649, 0.3275911
        %v662 = vmul.f32 %v650, 0.3275911
        %v663 = vmul.f32 %v651, 0.3275911
        %v664 = vmul.f32 %v652, 0.3275911
        %v665 = vmul.f32 %v653, 0.3275911
        %v666 = vmul.f32 %v654, 0.3275911
        %v667 = vmul.f32 %v655, 0.3275911
        %v668 = vmul.f32 %v656, 0.3275911
        %v669 = vadd.f32 %v657, 1.0
        %v670 = vadd.f32 %v658, 1.0
        %v671 = vadd.f32 %v659, 1.0
        %v672 = vadd.f32 %v660, 1.0
        %v673 = vadd.f32 %v661, 1.0
        %v674 = vadd.f32 %v662, 1.0
        %v675 = vadd.f32 %v663, 1.0
        %v676 = vadd.f32 %v664, 1.0
        %v677 = vadd.f32 %v665, 1.0
        %v678 = vadd.f32 %v666, 1.0
        %v679 = vadd.f32 %v667, 1.0
        %v680 = vadd.f32 %v668, 1.0
        %v681 = vrcp.pop %v669
        %v682 = vmul.f32 1.0, %v681
        %v683 = vrcp.pop %v670
        %v684 = vmul.f32 1.0, %v683
        %v685 = vrcp.pop %v671
        %v686 = vmul.f32 1.0, %v685
        %v687 = vrcp.pop %v672
        %v688 = vmul.f32 1.0, %v687
        %v689 = vrcp.pop %v673
        %v690 = vmul.f32 1.0, %v689
        %v691 = vrcp.pop %v674
        %v692 = vmul.f32 1.0, %v691
        %v693 = vrcp.pop %v675
        %v694 = vmul.f32 1.0, %v693
        %v695 = vrcp.pop %v676
        %v696 = vmul.f32 1.0, %v695
        %v697 = vrcp.pop %v677
        %v698 = vmul.f32 1.0, %v697
        %v699 = vrcp.pop %v678
        %v700 = vmul.f32 1.0, %v699
        %v701 = vrcp.pop %v679
        %v702 = vmul.f32 1.0, %v701
        %v703 = vrcp.pop %v680
        %v704 = vmul.f32 1.0, %v703
        %v705 = vmul.f32 %v682, 1.0614054
        %v706 = vmul.f32 %v684, 1.0614054
        %v707 = vmul.f32 %v686, 1.0614054
        %v708 = vmul.f32 %v688, 1.0614054
        %v709 = vmul.f32 %v690, 1.0614054
        %v710 = vmul.f32 %v692, 1.0614054
        %v711 = vmul.f32 %v694, 1.0614054
        %v712 = vmul.f32 %v696, 1.0614054
        %v713 = vmul.f32 %v698, 1.0614054
        %v714 = vmul.f32 %v700, 1.0614054
        %v715 = vmul.f32 %v702, 1.0614054
        %v716 = vmul.f32 %v704, 1.0614054
        %v717 = vadd.f32 %v705, -1.4531521
        %v718 = vadd.f32 %v706, -1.4531521
        %v719 = vadd.f32 %v707, -1.4531521
        %v720 = vadd.f32 %v708, -1.4531521
        %v721 = vadd.f32 %v709, -1.4531521
        %v722 = vadd.f32 %v710, -1.4531521
        %v723 = vadd.f32 %v711, -1.4531521
        %v724 = vadd.f32 %v712, -1.4531521
        %v725 = vadd.f32 %v713, -1.4531521
        %v726 = vadd.f32 %v714, -1.4531521
        %v727 = vadd.f32 %v715, -1.4531521
        %v728 = vadd.f32 %v716, -1.4531521
        %v729 = vmul.f32 %v717, %v682
        %v730 = vmul.f32 %v718, %v684
        %v731 = vmul.f32 %v719, %v686
        %v732 = vmul.f32 %v720, %v688
        %v733 = vmul.f32 %v721, %v690
        %v734 = vmul.f32 %v722, %v692
        %v735 = vmul.f32 %v723, %v694
        %v736 = vmul.f32 %v724, %v696
        %v737 = vmul.f32 %v725, %v698
        %v738 = vmul.f32 %v726, %v700
        %v739 = vmul.f32 %v727, %v702
        %v740 = vmul.f32 %v728, %v704
        %v741 = vadd.f32 %v729, 1.4214138
        %v742 = vadd.f32 %v730, 1.4214138
        %v743 = vadd.f32 %v731, 1.4214138
        %v744 = vadd.f32 %v732, 1.4214138
        %v745 = vadd.f32 %v733, 1.4214138
        %v746 = vadd.f32 %v734, 1.4214138
        %v747 = vadd.f32 %v735, 1.4214138
        %v748 = vadd.f32 %v736, 1.4214138
        %v749 = vadd.f32 %v737, 1.4214138
        %v750 = vadd.f32 %v738, 1.4214138
        %v751 = vadd.f32 %v739, 1.4214138
        %v752 = vadd.f32 %v740, 1.4214138
        %v753 = vmul.f32 %v741, %v682
        %v754 = vmul.f32 %v742, %v684
        %v755 = vmul.f32 %v743, %v686
        %v756 = vmul.f32 %v744, %v688
        %v757 = vmul.f32 %v745, %v690
        %v758 = vmul.f32 %v746, %v692
        %v759 = vmul.f32 %v747, %v694
        %v760 = vmul.f32 %v748, %v696
        %v761 = vmul.f32 %v749, %v698
        %v762 = vmul.f32 %v750, %v700
        %v763 = vmul.f32 %v751, %v702
        %v764 = vmul.f32 %v752, %v704
        %v765 = vadd.f32 %v753, -0.28449672
        %v766 = vadd.f32 %v754, -0.28449672
        %v767 = vadd.f32 %v755, -0.28449672
        %v768 = vadd.f32 %v756, -0.28449672
        %v769 = vadd.f32 %v757, -0.28449672
        %v770 = vadd.f32 %v758, -0.28449672
        %v771 = vadd.f32 %v759, -0.28449672
        %v772 = vadd.f32 %v760, -0.28449672
        %v773 = vadd.f32 %v761, -0.28449672
        %v774 = vadd.f32 %v762, -0.28449672
        %v775 = vadd.f32 %v763, -0.28449672
        %v776 = vadd.f32 %v764, -0.28449672
        %v777 = vmul.f32 %v765, %v682
        %v778 = vmul.f32 %v766, %v684
        %v779 = vmul.f32 %v767, %v686
        %v780 = vmul.f32 %v768, %v688
        %v781 = vmul.f32 %v769, %v690
        %v782 = vmul.f32 %v770, %v692
        %v783 = vmul.f32 %v771, %v694
        %v784 = vmul.f32 %v772, %v696
        %v785 = vmul.f32 %v773, %v698
        %v786 = vmul.f32 %v774, %v700
        %v787 = vmul.f32 %v775, %v702
        %v788 = vmul.f32 %v776, %v704
        %v789 = vadd.f32 %v777, 0.2548296
        %v790 = vadd.f32 %v778, 0.2548296
        %v791 = vadd.f32 %v779, 0.2548296
        %v792 = vadd.f32 %v780, 0.2548296
        %v793 = vadd.f32 %v781, 0.2548296
        %v794 = vadd.f32 %v782, 0.2548296
        %v795 = vadd.f32 %v783, 0.2548296
        %v796 = vadd.f32 %v784, 0.2548296
        %v797 = vadd.f32 %v785, 0.2548296
        %v798 = vadd.f32 %v786, 0.2548296
        %v799 = vadd.f32 %v787, 0.2548296
        %v800 = vadd.f32 %v788, 0.2548296
        %v801 = vmul.f32 %v789, %v682
        %v802 = vmul.f32 %v790, %v684
        %v803 = vmul.f32 %v791, %v686
        %v804 = vmul.f32 %v792, %v688
        %v805 = vmul.f32 %v793, %v690
        %v806 = vmul.f32 %v794, %v692
        %v807 = vmul.f32 %v795, %v694
        %v808 = vmul.f32 %v796, %v696
        %v809 = vmul.f32 %v797, %v698
        %v810 = vmul.f32 %v798, %v700
        %v811 = vmul.f32 %v799, %v702
        %v812 = vmul.f32 %v800, %v704
        %v813 = vsub.f32 0.0, %v645
        %v814 = vsub.f32 0.0, %v646
        %v815 = vsub.f32 0.0, %v647
        %v816 = vsub.f32 0.0, %v648
        %v817 = vsub.f32 0.0, %v649
        %v818 = vsub.f32 0.0, %v650
        %v819 = vsub.f32 0.0, %v651
        %v820 = vsub.f32 0.0, %v652
        %v821 = vsub.f32 0.0, %v653
        %v822 = vsub.f32 0.0, %v654
        %v823 = vsub.f32 0.0, %v655
        %v824 = vsub.f32 0.0, %v656
        %v825 = vmul.f32 %v813, %v645
        %v826 = vmul.f32 %v814, %v646
        %v827 = vmul.f32 %v815, %v647
        %v828 = vmul.f32 %v816, %v648
        %v829 = vmul.f32 %v817, %v649
        %v830 = vmul.f32 %v818, %v650
        %v831 = vmul.f32 %v819, %v651
        %v832 = vmul.f32 %v820, %v652
        %v833 = vmul.f32 %v821, %v653
        %v834 = vmul.f32 %v822, %v654
        %v835 = vmul.f32 %v823, %v655
        %v836 = vmul.f32 %v824, %v656
        %v837 = vmul.f32 %v825, 1.442695
        %v838 = vpow.pop %v837
        %v839 = vmul.f32 %v826, 1.442695
        %v840 = vpow.pop %v839
        %v841 = vmul.f32 %v827, 1.442695
        %v842 = vpow.pop %v841
        %v843 = vmul.f32 %v828, 1.442695
        %v844 = vpow.pop %v843
        %v845 = vmul.f32 %v829, 1.442695
        %v846 = vpow.pop %v845
        %v847 = vmul.f32 %v830, 1.442695
        %v848 = vpow.pop %v847
        %v849 = vmul.f32 %v831, 1.442695
        %v850 = vpow.pop %v849
        %v851 = vmul.f32 %v832, 1.442695
        %v852 = vpow.pop %v851
        %v853 = vmul.f32 %v833, 1.442695
        %v854 = vpow.pop %v853
        %v855 = vmul.f32 %v834, 1.442695
        %v856 = vpow.pop %v855
        %v857 = vmul.f32 %v835, 1.442695
        %v858 = vpow.pop %v857
        %v859 = vmul.f32 %v836, 1.442695
        %v860 = vpow.pop %v859
        %v861 = vmul.f32 %v801, %v838
        %v862 = vmul.f32 %v802, %v840
        %v863 = vmul.f32 %v803, %v842
        %v864 = vmul.f32 %v804, %v844
        %v865 = vmul.f32 %v805, %v846
        %v866 = vmul.f32 %v806, %v848
        %v867 = vmul.f32 %v807, %v850
        %v868 = vmul.f32 %v808, %v852
        %v869 = vmul.f32 %v809, %v854
        %v870 = vmul.f32 %v810, %v856
        %v871 = vmul.f32 %v811, %v858
        %v872 = vmul.f32 %v812, %v860
        %v873 = vsub.f32 1.0, %v861
        %v874 = vsub.f32 1.0, %v862
        %v875 = vsub.f32 1.0, %v863
        %v876 = vsub.f32 1.0, %v864
        %v877 = vsub.f32 1.0, %v865
        %v878 = vsub.f32 1.0, %v866
        %v879 = vsub.f32 1.0, %v867
        %v880 = vsub.f32 1.0, %v868
        %v881 = vsub.f32 1.0, %v869
        %v882 = vsub.f32 1.0, %v870
        %v883 = vsub.f32 1.0, %v871
        %v884 = vsub.f32 1.0, %v872
        %vm885 = vcmp.lt.f32.partialorder %v633, 0.0
        %vm886 = vcmp.lt.f32.partialorder %v634, 0.0
        %vm887 = vcmp.lt.f32.partialorder %v635, 0.0
        %vm888 = vcmp.lt.f32.partialorder %v636, 0.0
        %vm889 = vcmp.lt.f32.partialorder %v637, 0.0
        %vm890 = vcmp.lt.f32.partialorder %v638, 0.0
        %vm891 = vcmp.lt.f32.partialorder %v639, 0.0
        %vm892 = vcmp.lt.f32.partialorder %v640, 0.0
        %vm893 = vcmp.lt.f32.partialorder %v641, 0.0
        %vm894 = vcmp.lt.f32.partialorder %v642, 0.0
        %vm895 = vcmp.lt.f32.partialorder %v643, 0.0
        %vm896 = vcmp.lt.f32.partialorder %v644, 0.0
        %v897 = vsub.f32 0.0, %v873
        %v898 = vsub.f32 0.0, %v874
        %v899 = vsub.f32 0.0, %v875
        %v900 = vsub.f32 0.0, %v876
        %v901 = vsub.f32 0.0, %v877
        %v902 = vsub.f32 0.0, %v878
        %v903 = vsub.f32 0.0, %v879
        %v904 = vsub.f32 0.0, %v880
        %v905 = vsub.f32 0.0, %v881
        %v906 = vsub.f32 0.0, %v882
        %v907 = vsub.f32 0.0, %v883
        %v908 = vsub.f32 0.0, %v884
        %v909 = vsel %vm885, %v897, %v873
        %v910 = vsel %vm886, %v898, %v874
        %v911 = vsel %vm887, %v899, %v875
        %v912 = vsel %vm888, %v900, %v876
        %v913 = vsel %vm889, %v901, %v877
        %v914 = vsel %vm890, %v902, %v878
        %v915 = vsel %vm891, %v903, %v879
        %v916 = vsel %vm892, %v904, %v880
        %v917 = vsel %vm893, %v905, %v881
        %v918 = vsel %vm894, %v906, %v882
        %v919 = vsel %vm895, %v907, %v883
        %v920 = vsel %vm896, %v908, %v884
        %v921 = vadd.f32 %v909, 1.0
        %v922 = vadd.f32 %v910, 1.0
        %v923 = vadd.f32 %v911, 1.0
        %v924 = vadd.f32 %v912, 1.0
        %v925 = vadd.f32 %v913, 1.0
        %v926 = vadd.f32 %v914, 1.0
        %v927 = vadd.f32 %v915, 1.0
        %v928 = vadd.f32 %v916, 1.0
        %v929 = vadd.f32 %v917, 1.0
        %v930 = vadd.f32 %v918, 1.0
        %v931 = vadd.f32 %v919, 1.0
        %v932 = vadd.f32 %v920, 1.0
        %v933 = vmul.f32 %v621, %v921
        %v934 = vmul.f32 %v622, %v922
        %v935 = vmul.f32 %v623, %v923
        %v936 = vmul.f32 %v624, %v924
        %v937 = vmul.f32 %v625, %v925
        %v938 = vmul.f32 %v626, %v926
        %v939 = vmul.f32 %v627, %v927
        %v940 = vmul.f32 %v628, %v928
        %v941 = vmul.f32 %v629, %v929
        %v942 = vmul.f32 %v630, %v930
        %v943 = vmul.f32 %v631, %v931
        %v944 = vmul.f32 %v632, %v932
        %v945 = vmul.f32 %v933, %v563
        %v946 = vmul.f32 %v934, %v568
        %v947 = vmul.f32 %v935, %v573
        %v948 = vmul.f32 %v936, %v578
        %v949 = vmul.f32 %v937, %v583
        %v950 = vmul.f32 %v938, %v588
        %v951 = vmul.f32 %v939, %v593
        %v952 = vmul.f32 %v940, %v598
        %v953 = vmul.f32 %v941, %v603
        %v954 = vmul.f32 %v942, %v608
        %v955 = vmul.f32 %v943, %v613
        %v956 = vmul.f32 %v944, %v618
        %v957 = vld [vmem:[%s5] sm:$0xff]
        %v958 = vld [vmem:[%s5 + $0x8] sm:$0xff]
        %v959 = vld [vmem:[%s5 + $0x10] sm:$0xff]
        %v960 = vld [vmem:[%s5 + $0x18] sm:$0xff]
        %v961 = vld [vmem:[%s6] sm:$0x1]
        %v963 = vlaneseq
        %v964 = vshrl.u32 %v963, 7
        %v965 = vsub.s32 0, %v964
        %v966 = vrot.slane %v961, %v965
        %v969 = vsel %vm323, %v945, 0
        %v972 = vsel %vm323, %v946, 0
        %v975 = vsel %vm323, %v947, 0
        %v978 = vsel %vm323, %v948, 0
        %v981 = vsel %vm323, %v949, 0
        %v984 = vsel %vm323, %v950, 0
        %v987 = vsel %vm323, %v951, 0
        %v990 = vsel %vm323, %v952, 0
        %v993 = vsel %vm323, %v953, 0
        %v996 = vsel %vm323, %v954, 0
        %v999 = vsel %vm323, %v955, 0
        %v1002 = vsel %vm323, %v956, 0
        %1004 = vmatprep.subr.mxu0 0.0
        %1005 = vmatpush1.msra.mxu0 %v957
        %1006 = vmatprep.subr.mxu0 0.0
        %1007 = vmatpush1.msra.mxu0 %v958
        %1008 = vmatprep.subr.mxu0 0.0
        %1009 = vmatpush1.msra.mxu0 %v959
        %1010 = vmatprep.subr.mxu0 0.0
        %1011 = vmatpush1.msra.mxu0 %v960
        %1012 = vmatprep.subr.mxu0 0.0
        %1013 = vmatpush1.msra.mxu0 0.0
        %1014 = vmatprep.subr.mxu0 0.0
        %1015 = vmatpush1.msra.mxu0 0.0
        %1016 = vmatprep.subr.mxu0 0.0
        %1017 = vmatpush1.msra.mxu0 0.0
        %1018 = vmatprep.subr.mxu0 0.0
        %1019 = vmatpush1.msra.mxu0 0.0
        %1020 = vmatprep.subr.mxu0 0.0
        %1021 = vmatpush1.msra.mxu0 0.0
        %1022 = vmatprep.subr.mxu0 0.0
        %1023 = vmatpush1.msra.mxu0 0.0
        %1024 = vmatprep.subr.mxu0 0.0
        %1025 = vmatpush1.msra.mxu0 0.0
        %1026 = vmatprep.subr.mxu0 0.0
        %1027 = vmatpush1.msra.mxu0 0.0
        %1028 = vmatprep.subr.mxu0 0.0
        %1029 = vmatpush1.msra.mxu0 0.0
        %1030 = vmatprep.subr.mxu0 0.0
        %1031 = vmatpush1.msra.mxu0 0.0
        %1032 = vmatprep.subr.mxu0 0.0
        %1033 = vmatpush1.msra.mxu0 0.0
        %1034 = vmatprep.subr.mxu0 0.0
        %1035 = vmatpush1.msra.mxu0 0.0
        %1036 = vmatprep.subr.mxu0 0.0
        %1037 = vmatpush1.msra.mxu0 0.0
        %1038 = vmatprep.subr.mxu0 0.0
        %1039 = vmatpush1.msra.mxu0 0.0
        %1040 = vmatprep.subr.mxu0 0.0
        %1041 = vmatpush1.msra.mxu0 0.0
        %1042 = vmatprep.subr.mxu0 0.0
        %1043 = vmatpush1.msra.mxu0 0.0
        %1044 = vmatprep.subr.mxu0 0.0
        %1045 = vmatpush1.msra.mxu0 0.0
        %1046 = vmatprep.subr.mxu0 0.0
        %1047 = vmatpush1.msra.mxu0 0.0
        %1048 = vmatprep.subr.mxu0 0.0
        %1049 = vmatpush1.msra.mxu0 0.0
        %1050 = vmatprep.subr.mxu0 0.0
        %1051 = vmatpush1.msra.mxu0 0.0
        %1052 = vmatprep.subr.mxu0 0.0
        %1053 = vmatpush1.msra.mxu0 0.0
        %1054 = vmatprep.subr.mxu0 0.0
        %1055 = vmatpush1.msra.mxu0 0.0
        %1056 = vmatprep.subr.mxu0 0.0
        %1057 = vmatpush1.msra.mxu0 0.0
        %1058 = vmatprep.subr.mxu0 0.0
        %1059 = vmatpush1.msra.mxu0 0.0
        %1060 = vmatprep.subr.mxu0 0.0
        %1061 = vmatpush1.msra.mxu0 0.0
        %1062 = vmatprep.subr.mxu0 0.0
        %1063 = vmatpush1.msra.mxu0 0.0
        %1064 = vmatprep.subr.mxu0 0.0
        %1065 = vmatpush1.msra.mxu0 0.0
        %1066 = vmatprep.subr.mxu0 0.0
        %1067 = vmatpush1.msra.mxu0 0.0
        %1068 = vmatprep.mubr.f32.mxu0 0.0
        %1069 = vmatmul.mubr.f32.gmra.mrb[0].mxu0 %v969
        %v1070 = vpop.f32.mrb[0].mxu0
        %v1071 = vadd.f32 %v966, %v1070
        %v1072 = vpop.f32.mrb[0].mxu0
        %1073 = vmatprep.mubr.f32.mxu0 0.0
        %1074 = vmatmul.mubr.f32.gmra.mrb[0].mxu0 %v972
        %v1075 = vpop.f32.mrb[0].mxu0
        %v1076 = vadd.f32 %v966, %v1075
        %v1077 = vpop.f32.mrb[0].mxu0
        %1078 = vmatprep.mubr.f32.mxu0 0.0
        %1079 = vmatmul.mubr.f32.gmra.mrb[0].mxu0 %v975
        %v1080 = vpop.f32.mrb[0].mxu0
        %v1081 = vadd.f32 %v966, %v1080
        %v1082 = vpop.f32.mrb[0].mxu0
        %1083 = vmatprep.mubr.f32.mxu0 0.0
        %1084 = vmatmul.mubr.f32.gmra.mrb[0].mxu0 %v978
        %v1085 = vpop.f32.mrb[0].mxu0
        %v1086 = vadd.f32 %v966, %v1085
        %v1087 = vpop.f32.mrb[0].mxu0
        %1088 = vmatprep.mubr.f32.mxu0 0.0
        %1089 = vmatmul.mubr.f32.gmra.mrb[0].mxu0 %v981
        %v1090 = vpop.f32.mrb[0].mxu0
        %v1091 = vadd.f32 %v966, %v1090
        %v1092 = vpop.f32.mrb[0].mxu0
        %1093 = vmatprep.mubr.f32.mxu0 0.0
        %1094 = vmatmul.mubr.f32.gmra.mrb[0].mxu0 %v984
        %v1095 = vpop.f32.mrb[0].mxu0
        %v1096 = vadd.f32 %v966, %v1095
        %v1097 = vpop.f32.mrb[0].mxu0
        %1098 = vmatprep.mubr.f32.mxu0 0.0
        %1099 = vmatmul.mubr.f32.gmra.mrb[0].mxu0 %v987
        %v1100 = vpop.f32.mrb[0].mxu0
        %v1101 = vadd.f32 %v966, %v1100
        %v1102 = vpop.f32.mrb[0].mxu0
        %1103 = vmatprep.mubr.f32.mxu0 0.0
        %1104 = vmatmul.mubr.f32.gmra.mrb[0].mxu0 %v990
        %v1105 = vpop.f32.mrb[0].mxu0
        %v1106 = vadd.f32 %v966, %v1105
        %v1107 = vpop.f32.mrb[0].mxu0
        %1108 = vmatprep.mubr.f32.mxu0 0.0
        %1109 = vmatmul.mubr.f32.gmra.mrb[0].mxu0 %v993
        %v1110 = vpop.f32.mrb[0].mxu0
        %v1111 = vadd.f32 %v966, %v1110
        %v1112 = vpop.f32.mrb[0].mxu0
        %1113 = vmatprep.mubr.f32.mxu0 0.0
        %1114 = vmatmul.mubr.f32.gmra.mrb[0].mxu0 %v996
        %v1115 = vpop.f32.mrb[0].mxu0
        %v1116 = vadd.f32 %v966, %v1115
        %v1117 = vpop.f32.mrb[0].mxu0
        %1118 = vmatprep.mubr.f32.mxu0 0.0
        %1119 = vmatmul.mubr.f32.gmra.mrb[0].mxu0 %v999
        %v1120 = vpop.f32.mrb[0].mxu0
        %v1121 = vadd.f32 %v966, %v1120
        %v1122 = vpop.f32.mrb[0].mxu0
        %1123 = vmatprep.mubr.f32.mxu0 0.0
        %1124 = vmatmul.mubr.f32.gmra.mrb[0].mxu0 %v1002
        %v1125 = vpop.f32.mrb[0].mxu0
        %v1126 = vadd.f32 %v966, %v1125
        %v1127 = vpop.f32.mrb[0].mxu0
        %1128 = vdwg.mxu0
        %1129 = vst.msk [vmem:[%s280] sm:$0xff] %vm323, %v1071
        %1130 = vst.msk [vmem:[%s280 + $0x8] sm:$0xff] %vm323, %v1076
        %1131 = vst.msk [vmem:[%s280 + $0x10] sm:$0xff] %vm323, %v1081
        %1132 = vst.msk [vmem:[%s280 + $0x18] sm:$0xff] %vm323, %v1086
        %1133 = vst.msk [vmem:[%s280 + $0x20] sm:$0xff] %vm323, %v1091
        %1134 = vst.msk [vmem:[%s280 + $0x28] sm:$0xff] %vm323, %v1096
        %1135 = vst.msk [vmem:[%s280 + $0x30] sm:$0xff] %vm323, %v1101
        %1136 = vst.msk [vmem:[%s280 + $0x38] sm:$0xff] %vm323, %v1106
        %1137 = vst.msk [vmem:[%s280 + $0x40] sm:$0xff] %vm323, %v1111
        %1138 = vst.msk [vmem:[%s280 + $0x48] sm:$0xff] %vm323, %v1116
        %1139 = vst.msk [vmem:[%s280 + $0x50] sm:$0xff] %vm323, %v1121
        %1140 = vst.msk [vmem:[%s280 + $0x58] sm:$0xff] %vm323, %v1126
        %s1141 = sand.u32 %s178, 1
        %s1142 = sand.u32 %s178, 1
        %s1143 = smul.addr %s1142, 96
        %s1144 = scalar_lea.vmem [#allocation2], %s1143
        // Predicated region
        $region49: #{tpu_custom_call.1} parent=47 // pred_check
          %p1145 = pneg %p188
        $region50: #{tpu_custom_call.1} parent=47 // pred_check_branch
          %1147 = sbr.rel (%p1145) target = $region52
        $region51: #{tpu_custom_call.1} parent=47 // pred_region
          %s1148 = smul.u32 12, %s18
          %s1149 = ssub.s32 32, %s1148
          %p1150 = scmp.lt.s32.totalorder %s1149, 12
          %s1151 = scalar_select %p1150, %s1149, 12
          %s1152 = smul.u32 128, %s1151
          %p1153 = scmp.ne.s32.totalorder 0, %s1152
          %s1154 = smul.addr %s1148, 8
          %s1155 = scalar_lea.vmem %s7, %s1154
          // Predicated region
          $region53: #{tpu_custom_call.1} parent=51 // pred_check
            %p1156 = pneg %p1153
          $region54: #{tpu_custom_call.1} parent=51 // pred_check_branch
            %1158 = sbr.rel (%p1156) target = $region56
          $region55: #{tpu_custom_call.1} parent=51 // pred_region
            // Predicated region
            $region57: #{tpu_custom_call.1} parent=55 // pred_check
              _
            $region58: #{tpu_custom_call.1} parent=55 // pred_check_branch
              %1160 = sbr.rel (0) target = $region60
            $region59: #{tpu_custom_call.1} parent=55 // pred_region
              // Predicated region
              $region79: #{tpu_custom_call.1} parent=59 // pred_check
                _
              $region80: #{tpu_custom_call.1} parent=59 // pred_check_branch
                %1232 = sbr.rel (0) target = $region82
              $region81: #{tpu_custom_call.1} parent=59 // pred_region
                %s1233 = sdiv.u32.pop %s1151, 12
                %s1234 = srem.u32.pop %s1151, 12
                // While loop
                $region83: #{tpu_custom_call.1} parent=81 // loop_pre_header
                  _
                $region84: #{tpu_custom_call.1} parent=81 // loop_header
                  %s1236 = sphi 0, %s1238
                  %p1237 = scmp.ge.s32.totalorder %s1236, %s1233
                  %s1241 = sphi 0, %s1270
                  %s1242 = sphi %s1144, %s1273
                  %s1243 = sphi %s1155, %s1274
                $region85: #{tpu_custom_call.1} parent=81 // loop_header_branch
                  %1240 = sbr.rel (%p1237) target = $region89
                $region86: #{tpu_custom_call.1} parent=81 // loop_body
                  %v1244 = vld [vmem:[%s1242] sm:$0xff]
                  %1245 = vst [vmem:[%s1243] sm:$0xff] %v1244
                  %v1246 = vld [vmem:[%s1242 + $0x8] sm:$0xff]
                  %1247 = vst [vmem:[%s1243 + $0x8] sm:$0xff] %v1246
                  %v1248 = vld [vmem:[%s1242 + $0x10] sm:$0xff]
                  %1249 = vst [vmem:[%s1243 + $0x10] sm:$0xff] %v1248
                  %v1250 = vld [vmem:[%s1242 + $0x18] sm:$0xff]
                  %1251 = vst [vmem:[%s1243 + $0x18] sm:$0xff] %v1250
                  %v1252 = vld [vmem:[%s1242 + $0x20] sm:$0xff]
                  %1253 = vst [vmem:[%s1243 + $0x20] sm:$0xff] %v1252
                  %v1254 = vld [vmem:[%s1242 + $0x28] sm:$0xff]
                  %1255 = vst [vmem:[%s1243 + $0x28] sm:$0xff] %v1254
                  %v1256 = vld [vmem:[%s1242 + $0x30] sm:$0xff]
                  %1257 = vst [vmem:[%s1243 + $0x30] sm:$0xff] %v1256
                  %v1258 = vld [vmem:[%s1242 + $0x38] sm:$0xff]
                  %1259 = vst [vmem:[%s1243 + $0x38] sm:$0xff] %v1258
                  %v1260 = vld [vmem:[%s1242 + $0x40] sm:$0xff]
                  %1261 = vst [vmem:[%s1243 + $0x40] sm:$0xff] %v1260
                  %v1262 = vld [vmem:[%s1242 + $0x48] sm:$0xff]
                  %1263 = vst [vmem:[%s1243 + $0x48] sm:$0xff] %v1262
                  %v1264 = vld [vmem:[%s1242 + $0x50] sm:$0xff]
                  %1265 = vst [vmem:[%s1243 + $0x50] sm:$0xff] %v1264
                  %v1266 = vld [vmem:[%s1242 + $0x58] sm:$0xff]
                  %1267 = vst [vmem:[%s1243 + $0x58] sm:$0xff] %v1266
                  %s1268 = sadd.s32 1, %s1241
                  %p1269 = scmp.ge.s32.totalorder %s1268, %s1233
                  %s1270 = scalar_select %p1269, 0, %s1268
                  %s1271 = smul.u32 %s1270, 96
                  %s1272 = smul.u32 %s1270, 96
                  %s1273 = scalar_lea.vmem %s1144, %s1271 [#allocation2]
                  %s1274 = scalar_lea.vmem %s1155, %s1272
                $region87: #{tpu_custom_call.1} parent=81 // loop_footer
                  %s1238 = sadd.s32 %s1236, 1
                $region88: #{tpu_custom_call.1} parent=81 // loop_footer_branch
                  %1235 = sbr.rel target = $region84
                $region89: #{tpu_custom_call.1} parent=81 // loop_exit
                  _
                %s1275 = sdiv.u32.pop %s1151, 12
                %s1276 = srem.u32.pop %s1151, 12
                %s1277 = smul.u32 %s1275, 12
                %s1278 = smul.u32 8, %s1277
                %s1279 = scalar_lea.vmem %s1144, %s1278 [#allocation2]
                %s1280 = smul.u32 8, %s1277
                %s1281 = scalar_lea.vmem %s1155, %s1280
                // While loop
                $region90: #{tpu_custom_call.1} parent=81 // loop_pre_header
                  _
                $region91: #{tpu_custom_call.1} parent=81 // loop_header
                  %s1283 = sphi 0, %s1285
                  %p1284 = scmp.ge.s32.totalorder %s1283, %s1276
                  %s1288 = sphi 0, %s1295
                  %s1289 = sphi %s1279, %s1298
                  %s1290 = sphi %s1281, %s1299
                $region92: #{tpu_custom_call.1} parent=81 // loop_header_branch
                  %1287 = sbr.rel (%p1284) target = $region96
                $region93: #{tpu_custom_call.1} parent=81 // loop_body
                  %v1291 = vld [vmem:[%s1289] sm:$0xff]
                  %1292 = vst [vmem:[%s1290] sm:$0xff] %v1291
                  %s1293 = sadd.s32 1, %s1288
                  %p1294 = scmp.ge.s32.totalorder %s1293, %s1276
                  %s1295 = scalar_select %p1294, 0, %s1293
                  %s1296 = smul.u32 %s1295, 8
                  %s1297 = smul.u32 %s1295, 8
                  %s1298 = scalar_lea.vmem %s1279, %s1296 [#allocation2]
                  %s1299 = scalar_lea.vmem %s1281, %s1297
                $region94: #{tpu_custom_call.1} parent=81 // loop_footer
                  %s1285 = sadd.s32 %s1283, 1
                $region95: #{tpu_custom_call.1} parent=81 // loop_footer_branch
                  %1282 = sbr.rel target = $region91
                $region96: #{tpu_custom_call.1} parent=81 // loop_exit
                  _
              $region82: #{tpu_custom_call.1} parent=59 // pred_fallthru
                _
              // Predicated region
              $region97: #{tpu_custom_call.1} parent=59 // pred_check
                _
              $region98: #{tpu_custom_call.1} parent=59 // pred_check_branch
                %1301 = sbr.rel target = $region100
              $region99: #{tpu_custom_call.1} parent=59 // pred_region
                _
              $region100: #{tpu_custom_call.1} parent=59 // pred_fallthru
                _
            $region60: #{tpu_custom_call.1} parent=55 // pred_fallthru
              _
            // Predicated region
            $region61: #{tpu_custom_call.1} parent=55 // pred_check
              _
            $region62: #{tpu_custom_call.1} parent=55 // pred_check_branch
              %1162 = sbr.rel target = $region64
            $region63: #{tpu_custom_call.1} parent=55 // pred_region
              %s1164 = sdiv.u32.pop %s1151, 12
              %s1165 = srem.u32.pop %s1151, 12
              // While loop
              $region65: #{tpu_custom_call.1} parent=63 // loop_pre_header
                _
              $region66: #{tpu_custom_call.1} parent=63 // loop_header
                %s1167 = sphi 0, %s1169
                %p1168 = scmp.ge.s32.totalorder %s1167, %s1164
                %s1172 = sphi 0, %s1201
                %s1173 = sphi %s1144, %s1204
                %s1174 = sphi %s1155, %s1205
              $region67: #{tpu_custom_call.1} parent=63 // loop_header_branch
                %1171 = sbr.rel (%p1168) target = $region71
              $region68: #{tpu_custom_call.1} parent=63 // loop_body
                %v1175 = vld [vmem:[%s1173] sm:$0xff]
                %1176 = vst [vmem:[%s1174] sm:$0xff] %v1175
                %v1177 = vld [vmem:[%s1173 + $0x8] sm:$0xff]
                %1178 = vst [vmem:[%s1174 + $0x8] sm:$0xff] %v1177
                %v1179 = vld [vmem:[%s1173 + $0x10] sm:$0xff]
                %1180 = vst [vmem:[%s1174 + $0x10] sm:$0xff] %v1179
                %v1181 = vld [vmem:[%s1173 + $0x18] sm:$0xff]
                %1182 = vst [vmem:[%s1174 + $0x18] sm:$0xff] %v1181
                %v1183 = vld [vmem:[%s1173 + $0x20] sm:$0xff]
                %1184 = vst [vmem:[%s1174 + $0x20] sm:$0xff] %v1183
                %v1185 = vld [vmem:[%s1173 + $0x28] sm:$0xff]
                %1186 = vst [vmem:[%s1174 + $0x28] sm:$0xff] %v1185
                %v1187 = vld [vmem:[%s1173 + $0x30] sm:$0xff]
                %1188 = vst [vmem:[%s1174 + $0x30] sm:$0xff] %v1187
                %v1189 = vld [vmem:[%s1173 + $0x38] sm:$0xff]
                %1190 = vst [vmem:[%s1174 + $0x38] sm:$0xff] %v1189
                %v1191 = vld [vmem:[%s1173 + $0x40] sm:$0xff]
                %1192 = vst [vmem:[%s1174 + $0x40] sm:$0xff] %v1191
                %v1193 = vld [vmem:[%s1173 + $0x48] sm:$0xff]
                %1194 = vst [vmem:[%s1174 + $0x48] sm:$0xff] %v1193
                %v1195 = vld [vmem:[%s1173 + $0x50] sm:$0xff]
                %1196 = vst [vmem:[%s1174 + $0x50] sm:$0xff] %v1195
                %v1197 = vld [vmem:[%s1173 + $0x58] sm:$0xff]
                %1198 = vst [vmem:[%s1174 + $0x58] sm:$0xff] %v1197
                %s1199 = sadd.s32 1, %s1172
                %p1200 = scmp.ge.s32.totalorder %s1199, %s1164
                %s1201 = scalar_select %p1200, 0, %s1199
                %s1202 = smul.u32 %s1201, 96
                %s1203 = smul.u32 %s1201, 96
                %s1204 = scalar_lea.vmem %s1144, %s1202 [#allocation2]
                %s1205 = scalar_lea.vmem %s1155, %s1203
              $region69: #{tpu_custom_call.1} parent=63 // loop_footer
                %s1169 = sadd.s32 %s1167, 1
              $region70: #{tpu_custom_call.1} parent=63 // loop_footer_branch
                %1166 = sbr.rel target = $region66
              $region71: #{tpu_custom_call.1} parent=63 // loop_exit
                _
              %s1206 = sdiv.u32.pop %s1151, 12
              %s1207 = srem.u32.pop %s1151, 12
              %s1208 = smul.u32 %s1206, 12
              %s1209 = smul.u32 8, %s1208
              %s1210 = scalar_lea.vmem %s1144, %s1209 [#allocation2]
              %s1211 = smul.u32 8, %s1208
              %s1212 = scalar_lea.vmem %s1155, %s1211
              // While loop
              $region72: #{tpu_custom_call.1} parent=63 // loop_pre_header
                _
              $region73: #{tpu_custom_call.1} parent=63 // loop_header
                %s1214 = sphi 0, %s1216
                %p1215 = scmp.ge.s32.totalorder %s1214, %s1207
                %s1219 = sphi 0, %s1226
                %s1220 = sphi %s1210, %s1229
                %s1221 = sphi %s1212, %s1230
              $region74: #{tpu_custom_call.1} parent=63 // loop_header_branch
                %1218 = sbr.rel (%p1215) target = $region78
              $region75: #{tpu_custom_call.1} parent=63 // loop_body
                %v1222 = vld [vmem:[%s1220] sm:$0xff]
                %1223 = vst [vmem:[%s1221] sm:$0xff] %v1222
                %s1224 = sadd.s32 1, %s1219
                %p1225 = scmp.ge.s32.totalorder %s1224, %s1207
                %s1226 = scalar_select %p1225, 0, %s1224
                %s1227 = smul.u32 %s1226, 8
                %s1228 = smul.u32 %s1226, 8
                %s1229 = scalar_lea.vmem %s1210, %s1227 [#allocation2]
                %s1230 = scalar_lea.vmem %s1212, %s1228
              $region76: #{tpu_custom_call.1} parent=63 // loop_footer
                %s1216 = sadd.s32 %s1214, 1
              $region77: #{tpu_custom_call.1} parent=63 // loop_footer_branch
                %1213 = sbr.rel target = $region73
              $region78: #{tpu_custom_call.1} parent=63 // loop_exit
                _
            $region64: #{tpu_custom_call.1} parent=55 // pred_fallthru
              _
          $region56: #{tpu_custom_call.1} parent=51 // pred_fallthru
            _
          %1302 = vnop
        $region52: #{tpu_custom_call.1} parent=47 // pred_fallthru
          _
      $region48: #{tpu_custom_call.1} parent=5 // pred_fallthru
        _
      %p1303 = scmp.le.s32.totalorder 2, %s13
      // Predicated region
      $region101: #{tpu_custom_call.1} parent=5 // pred_check
        %p1304 = pneg %p1303
      $region102: #{tpu_custom_call.1} parent=5 // pred_check_branch
        %1306 = sbr.rel (%p1304) target = $region104
      $region103: #{tpu_custom_call.1} parent=5 // pred_region
        %s1307 = ssub.s32 %s13, 2
        // Predicated region
        $region105: #{tpu_custom_call.1} parent=103 // pred_check
          %p1308 = pneg %p194
        $region106: #{tpu_custom_call.1} parent=103 // pred_check_branch
          %1310 = sbr.rel (%p1308) target = $region108
        $region107: #{tpu_custom_call.1} parent=103 // pred_region
          %s1311 = sand.u32 %s179, 1
          %s1312 = sand.u32 %s179, 1
          %s1313 = smul.addr %s1312, 96
          %s1314 = scalar_lea.vmem [#allocation2], %s1313
        $region108: #{tpu_custom_call.1} parent=103 // pred_fallthru
          _
      $region104: #{tpu_custom_call.1} parent=5 // pred_fallthru
        _
    $region6: #{tpu_custom_call.1} parent=1 // loop_footer
      %s17 = sadd.s32 1, %s13
    $region7: #{tpu_custom_call.1} parent=1 // loop_footer_branch
      %12 = sbr.rel target = $region3
    $region8: #{tpu_custom_call.1} parent=1 // loop_exit
      _

</llo_original>
